<compile_context>
chip_gen: v7x
topology: tpu7x:2x2x1
jax: 0.10.0
libtpu: 0.0.40
codegen_flags: <defaults>
</compile_context>

<pallas_src>
import jax
import jax.numpy as jnp
from jax.experimental import pallas as pl
from jax.experimental.pallas import tpu as pltpu

LANE = 128  # TPU lane width


def _round_up(n, m):
    return ((n + m - 1) // m) * m


def _mlp_kernel(x_ref, w1_ref, b1_ref, w2_ref, b2_ref, w3_ref, b3_ref, o_ref):
    # Layer 1: bf16 MXU matmul (x arrives bf16), f32 accumulation; bias + ReLU
    # in f32, result narrowed to bf16 for the next MXU stage.
    h1 = jnp.dot(x_ref[...], w1_ref[...],
                 preferred_element_type=jnp.float32)            # (TB, H1) f32
    h1 = jnp.maximum(h1 + b1_ref[...], 0.0).astype(jnp.bfloat16)
    # Dropout(p1): identity in eval mode.

    # Layer 2: bf16 MXU matmul, f32 accumulation, bias + ReLU, narrow to bf16.
    h2 = jnp.dot(h1, w2_ref[...],
                 preferred_element_type=jnp.float32)            # (TB, H2) f32
    h2 = jnp.maximum(h2 + b2_ref[...], 0.0).astype(jnp.bfloat16)
    # Dropout(p2): identity in eval mode.

    # Layer 3 (H2 -> 1) as a transposed contraction on the MXU so the output
    # block is lane-dense (batch on the lane axis):
    #   (1, H2) . (TB, H2)^T -> (1, TB)
    out = jax.lax.dot_general(
        w3_ref[...], h2,
        dimension_numbers=(((1,), (1,)), ((), ())),
        preferred_element_type=jnp.float32)                     # (1, TB) f32
    # b3 is a scalar read from SMEM.
    o_ref[...] = (out + b3_ref[0, 0]).astype(o_ref.dtype)


def mlp_regressor_forward(x, params, *, tile_batch=4096):
    """x: (batch, input_dim) float32 (or bf16). Returns (batch,) float32."""
    w1, b1, w2, b2, w3, b3 = params
    B, D = x.shape
    H1 = w1.shape[1]
    H2 = w2.shape[1]

    # Batch tile: multiple of 128 (lane width -- the batch ends up on the lane
    # axis of the output), large enough to amortize the ~0.35us per-step
    # overhead, and capped so the "parallel" grid keeps >= 2 tiles for v7x.
    TB = _round_up(min(int(tile_batch), _round_up(B, LANE)), LANE)
    if _round_up(B, LANE) >= 2 * LANE:
        TB = min(TB, _round_up((B + 1) // 2, LANE))
    grid_b = pl.cdiv(B, TB)
    Bp = grid_b * TB

    # Feed x to the kernel in bf16 (layer 1 computes in bf16 anyway) -- halves
    # the dominant HBM stream and the double-buffered x block.
    xp = x.astype(jnp.bfloat16)
    if Bp != B:
        xp = jnp.pad(xp, ((0, Bp - B), (0, 0)))

    out = pl.pallas_call(
        _mlp_kernel,
        out_shape=jax.ShapeDtypeStruct((1, Bp), jnp.float32),
        grid_spec=pltpu.PrefetchScalarGridSpec(
            num_scalar_prefetch=0,
            grid=(grid_b,),
            in_specs=[
                pl.BlockSpec((TB, D), lambda i: (i, 0)),   # x: tiled on batch (bf16)
                pl.BlockSpec((D, H1), lambda i: (0, 0)),   # weights/biases stay
                pl.BlockSpec((1, H1), lambda i: (0, 0)),   #   VMEM-resident across
                pl.BlockSpec((H1, H2), lambda i: (0, 0)),  #   all batch tiles
                pl.BlockSpec((1, H2), lambda i: (0, 0)),
                pl.BlockSpec((1, H2), lambda i: (0, 0)),   # w3 row (bf16)
                pl.BlockSpec(memory_space=pltpu.MemorySpace.SMEM),  # b3 scalar
            ],
            # Lane-dense output: (1, TB) blocks of a (1, Bp) array.
            out_specs=pl.BlockSpec((1, TB), lambda i: (0, i)),
        ),
        compiler_params=pltpu.CompilerParams(
            # Batch tiles are independent -> let v7x shard them across 2 TCs.
            dimension_semantics=("parallel",),
            # Explicit scoped-VMEM budget: above v5e's 16 MiB default, within
            # v7x's 64 MiB physical VMEM.  ~10 MiB actually used at TB=4096.
            vmem_limit_bytes=32 * 1024 * 1024,
        ),
    )(xp, w1, b1, w2, b2, w3, b3)
    return out[0, :B]  # .squeeze(1) + drop batch padding


def init_params(key, input_dim, hidden_dim1, hidden_dim2):
    """Deterministic init mimicking nn.Linear's U(-1/sqrt(fan_in), 1/sqrt(fan_in)).
    w1/w2 stored as (in, out) bf16; w3 stored as a (1, H2) bf16 row; biases f32."""
    def linear(k, fan_in, fan_out):
        kw, kb = jax.random.split(k)
        bound = 1.0 / jnp.sqrt(float(fan_in))
        w = jax.random.uniform(kw, (fan_in, fan_out), jnp.float32, -bound, bound)
        b = jax.random.uniform(kb, (1, fan_out), jnp.float32, -bound, bound)
        return w, b

    k1, k2, k3 = jax.random.split(key, 3)
    w1, b1 = linear(k1, input_dim, hidden_dim1)
    w2, b2 = linear(k2, hidden_dim1, hidden_dim2)
    w3, b3 = linear(k3, hidden_dim2, 1)
    return (w1.astype(jnp.bfloat16), b1,
            w2.astype(jnp.bfloat16), b2,
            w3.T.astype(jnp.bfloat16),   # (1, H2) row == nn.Linear(h2, 1).weight
            b3)                          # (1, 1) f32


if __name__ == "__main__":
    key = jax.random.PRNGKey(0)
    k_x, k_p = jax.random.split(key)

    # Small but non-trivial batch so tiling / padding / multi-tile grid are
    # exercised: B=1000 -> TB=512, grid=(2,), padded to 1024.
    batch, input_dim, hidden_dim1, hidden_dim2 = 1000, 16, 32, 32
    x = jax.random.normal(k_x, (batch, input_dim), dtype=jnp.float32)
    params = init_params(k_p, input_dim, hidden_dim1, hidden_dim2)

    y = mlp_regressor_forward(x, params)
    jax.block_until_ready(y)

    # Reference in plain JAX mirroring the kernel's dtypes
    # (eval-mode dropout = identity; x/h1/h2 in bf16, f32 accumulation).
    w1, b1, w2, b2, w3, b3 = params
    xb = x.astype(jnp.bfloat16)
    h1 = jnp.maximum(
        jnp.dot(xb, w1, preferred_element_type=jnp.float32) + b1, 0.0
    ).astype(jnp.bfloat16)
    h2 = jnp.maximum(
        jnp.dot(h1, w2, preferred_element_type=jnp.float32) + b2, 0.0
    ).astype(jnp.bfloat16)
    y_ref = jnp.dot(h2, w3[0], preferred_element_type=jnp.float32) + b3[0, 0]

    assert y.shape == (batch,)
    assert jnp.allclose(y, y_ref, atol=2e-3, rtol=2e-3), float(
        jnp.max(jnp.abs(y - y_ref)))

    print("KERNEL_OK")
</pallas_src>

<mosaic_0001>
module attributes {stable_mosaic.version = 11 : i64} {
  func.func @_mlp_kernel(%arg0: i32, %arg1: memref<512x16xbf16, #tpu.memory_space<vmem>>, %arg2: memref<16x32xbf16, #tpu.memory_space<vmem>>, %arg3: memref<1x32xf32, #tpu.memory_space<vmem>>, %arg4: memref<32x32xbf16, #tpu.memory_space<vmem>>, %arg5: memref<1x32xf32, #tpu.memory_space<vmem>>, %arg6: memref<1x32xbf16, #tpu.memory_space<vmem>>, %arg7: memref<1x1xf32, #tpu.memory_space<smem>>, %arg8: memref<1x512xf32, #tpu.memory_space<vmem>>) attributes {dimension_semantics = [#tpu.dimension_semantics<parallel>], iteration_bounds = array<i64: 2>, scalar_prefetch = 0 : i64, scratch_operands = 0 : i64, tpu.core_type = #tpu.core_type<tc>, window_params = [{transform_indices = @transform_0, window_bounds = array<i64: 512, 16>}, {pipeline_mode = #tpu.pipeline_mode<synchronous>, transform_indices = @transform_1, window_bounds = array<i64: 16, 32>}, {pipeline_mode = #tpu.pipeline_mode<synchronous>, transform_indices = @transform_2, window_bounds = array<i64: 1, 32>}, {pipeline_mode = #tpu.pipeline_mode<synchronous>, transform_indices = @transform_3, window_bounds = array<i64: 32, 32>}, {pipeline_mode = #tpu.pipeline_mode<synchronous>, transform_indices = @transform_4, window_bounds = array<i64: 1, 32>}, {pipeline_mode = #tpu.pipeline_mode<synchronous>, transform_indices = @transform_5, window_bounds = array<i64: 1, 32>}, {transform_indices = @transform_6, window_bounds = array<i64: 1, 1>}, {transform_indices = @transform_7, window_bounds = array<i64: 1, 512>}]} {
    %c0 = arith.constant 0 : index
    %c0_0 = arith.constant 0 : index
    %0 = vector.load %arg1[%c0, %c0_0] : memref<512x16xbf16, #tpu.memory_space<vmem>>, vector<512x16xbf16>
    %c0_1 = arith.constant 0 : index
    %c0_2 = arith.constant 0 : index
    %1 = vector.load %arg2[%c0_1, %c0_2] : memref<16x32xbf16, #tpu.memory_space<vmem>>, vector<16x32xbf16>
    %cst = arith.constant dense<0.000000e+00> : vector<512x32xf32>
    %2 = tpu.matmul %0, %1, %cst {dimension_numbers = #tpu.dot_dimension_numbers<[1], [0], [0], [1], [0, 0, 1, 1], [], []>} : vector<512x16xbf16>, vector<16x32xbf16>, vector<512x32xf32> -> vector<512x32xf32>
    %c0_3 = arith.constant 0 : index
    %c0_4 = arith.constant 0 : index
    %3 = vector.load %arg3[%c0_3, %c0_4] : memref<1x32xf32, #tpu.memory_space<vmem>>, vector<1x32xf32>
    %4 = vector.broadcast %3 : vector<1x32xf32> to vector<512x32xf32>
    %5 = arith.addf %2, %4 : vector<512x32xf32>
    %cst_5 = arith.constant 0.000000e+00 : f32
    %6 = vector.broadcast %cst_5 : f32 to vector<512x32xf32>
    %7 = arith.maximumf %5, %6 : vector<512x32xf32>
    %8 = arith.truncf %7 : vector<512x32xf32> to vector<512x32xbf16>
    %c0_6 = arith.constant 0 : index
    %c0_7 = arith.constant 0 : index
    %9 = vector.load %arg4[%c0_6, %c0_7] : memref<32x32xbf16, #tpu.memory_space<vmem>>, vector<32x32xbf16>
    %cst_8 = arith.constant dense<0.000000e+00> : vector<512x32xf32>
    %10 = tpu.matmul %8, %9, %cst_8 {dimension_numbers = #tpu.dot_dimension_numbers<[1], [0], [0], [1], [0, 0, 1, 1], [], []>} : vector<512x32xbf16>, vector<32x32xbf16>, vector<512x32xf32> -> vector<512x32xf32>
    %c0_9 = arith.constant 0 : index
    %c0_10 = arith.constant 0 : index
    %11 = vector.load %arg5[%c0_9, %c0_10] : memref<1x32xf32, #tpu.memory_space<vmem>>, vector<1x32xf32>
    %12 = vector.broadcast %11 : vector<1x32xf32> to vector<512x32xf32>
    %13 = arith.addf %10, %12 : vector<512x32xf32>
    %cst_11 = arith.constant 0.000000e+00 : f32
    %14 = vector.broadcast %cst_11 : f32 to vector<512x32xf32>
    %15 = arith.maximumf %13, %14 : vector<512x32xf32>
    %16 = arith.truncf %15 : vector<512x32xf32> to vector<512x32xbf16>
    %c0_12 = arith.constant 0 : index
    %c0_13 = arith.constant 0 : index
    %17 = vector.load %arg6[%c0_12, %c0_13] : memref<1x32xbf16, #tpu.memory_space<vmem>>, vector<1x32xbf16>
    %cst_14 = arith.constant dense<0.000000e+00> : vector<1x512xf32>
    %18 = tpu.matmul %17, %16, %cst_14 {dimension_numbers = #tpu.dot_dimension_numbers<[1], [1], [0], [0], [0, 0, 1, 0], [], []>} : vector<1x32xbf16>, vector<512x32xbf16>, vector<1x512xf32> -> vector<1x512xf32>
    %c0_15 = arith.constant 0 : index
    %c0_16 = arith.constant 0 : index
    %19 = memref.load %arg7[%c0_15, %c0_16] : memref<1x1xf32, #tpu.memory_space<smem>>
    %20 = vector.broadcast %19 : f32 to vector<1x512xf32>
    %21 = arith.addf %18, %20 : vector<1x512xf32>
    %c0_17 = arith.constant 0 : index
    %c0_18 = arith.constant 0 : index
    %22 = vector.load %arg8[%c0_17, %c0_18] : memref<1x512xf32, #tpu.memory_space<vmem>>, vector<1x512xf32>
    tpu.vector_store %arg8[%c0_17, %c0_18], %21 {strides = array<i32>} : memref<1x512xf32, #tpu.memory_space<vmem>>, vector<1x512xf32>,
    return
  }
  func.func @transform_0(%arg0: i32) -> (i32, i32) {
    %c0_i32 = arith.constant 0 : i32
    %c0_i32_0 = arith.constant 0 : i32
    return %arg0, %c0_i32 : i32, i32
  }
  func.func @transform_1(%arg0: i32) -> (i32, i32) {
    %c0_i32 = arith.constant 0 : i32
    %c0_i32_0 = arith.constant 0 : i32
    %c0_i32_1 = arith.constant 0 : i32
    return %c0_i32, %c0_i32_0 : i32, i32
  }
  func.func @transform_2(%arg0: i32) -> (i32, i32) {
    %c0_i32 = arith.constant 0 : i32
    %c0_i32_0 = arith.constant 0 : i32
    %c0_i32_1 = arith.constant 0 : i32
    return %c0_i32, %c0_i32_0 : i32, i32
  }
  func.func @transform_3(%arg0: i32) -> (i32, i32) {
    %c0_i32 = arith.constant 0 : i32
    %c0_i32_0 = arith.constant 0 : i32
    %c0_i32_1 = arith.constant 0 : i32
    return %c0_i32, %c0_i32_0 : i32, i32
  }
  func.func @transform_4(%arg0: i32) -> (i32, i32) {
    %c0_i32 = arith.constant 0 : i32
    %c0_i32_0 = arith.constant 0 : i32
    %c0_i32_1 = arith.constant 0 : i32
    return %c0_i32, %c0_i32_0 : i32, i32
  }
  func.func @transform_5(%arg0: i32) -> (i32, i32) {
    %c0_i32 = arith.constant 0 : i32
    %c0_i32_0 = arith.constant 0 : i32
    %c0_i32_1 = arith.constant 0 : i32
    return %c0_i32, %c0_i32_0 : i32, i32
  }
  func.func @transform_6(%arg0: i32) -> (i32, i32) {
    %c0_i32 = arith.constant 0 : i32
    %c0_i32_0 = arith.constant 0 : i32
    %c0_i32_1 = arith.constant 0 : i32
    return %c0_i32, %c0_i32_0 : i32, i32
  }
  func.func @transform_7(%arg0: i32) -> (i32, i32) {
    %c0_i32 = arith.constant 0 : i32
    %c0_i32_0 = arith.constant 0 : i32
    return %c0_i32, %arg0 : i32, i32
  }
}

</mosaic_0001>

<llo_original>
// kernel: tpu_custom_call.1
$region0: #{tpu_custom_call.1}
  #allocation0 [shape = 'u32[]', space=smem, size = 0x4, offset = 0x4, fixed_abs, tag = 'smem constant byte address 0x4 - core index']
  #allocation1 [shape = 'u32[144,128]{1,0:T(1,128)}', space=vmem, size = 0x12000, scoped, tag = 'internal scratch']
  #allocation2 [shape = 'f32[1,1]{1,0:T(1,128)S(6)}', space=smem, size = 0x200, scoped, tag = 'scoped memory for tpu_custom_call.1']
  %s0 = inlined_call_operand.vmem [shape: bf16[1024,16], index: 0, kind: input, shape index: {}]
  %s1 = inlined_call_operand.vmem [shape: bf16[16,32], index: 1, kind: input, shape index: {}]
  %s2 = inlined_call_operand.vmem [shape: f32[1,32], index: 2, kind: input, shape index: {}]
  %s3 = inlined_call_operand.vmem [shape: bf16[32,32], index: 3, kind: input, shape index: {}]
  %s4 = inlined_call_operand.vmem [shape: f32[1,32], index: 4, kind: input, shape index: {}]
  %s5 = inlined_call_operand.vmem [shape: bf16[1,32], index: 5, kind: input, shape index: {}]
  %s6 = inlined_call_operand.<no memory space> [shape: f32[1,1], index: 6, kind: input, shape index: {}]
  %s7 = inlined_call_operand.hbm [shape: f32[1,1024], index: 7, kind: output, shape index: {}]
  %s8 = sld [smem:[#allocation0]]
  $region61: #{tpu_custom_call.1} parent=0
    _
  %s10 = ssub.s32 1, %s8
  %s11 = scalar_select 0, %s10, %s8
  %12 = sst [smem:[#allocation2]] %s6
  $region1: #{tpu_custom_call.1} parent=0
    #allocation3 [shape = 'u8[4096]{0}', space=vmem, size = 0x1000, scoped, tag = 'output window, operand 0']
    #allocation4 [shape = 's32[2]{0}', space=sflag, size = 0x8, scoped, tag = 'scoped memory for tpu_custom_call.1']
    %13 = vsyncpa [#allocation4], 0
    %s14 = scalar_lea.sflag [#allocation4], 1
    %15 = vsyncpa %s14, 0
    loop: start=0, step=1, limit=4
    $region2: #{tpu_custom_call.1} parent=1 // loop_pre_header
      _
    $region3: #{tpu_custom_call.1} parent=1 // loop_header
      %s17 = sphi 0, %s21
      %p18 = scmp.ge.s32.totalorder %s17, 4
      %s27 = sphi 0, %s29
      %s30 = sphi 0, %s27
      %s31 = sphi 0, %s30
      %s47 = sphi 0, %s31
      %s51 = sphi 0, %s51
      %s53 = sphi 0, %s51
      %s54 = sphi 0, %s53
      %s68 = sphi 0, %s54
      %s72 = sphi 0, %s72
      %s74 = sphi 0, %s72
      %s75 = sphi 0, %s74
      %s89 = sphi 0, %s75
      %s93 = sphi 0, %s93
      %s95 = sphi 0, %s93
      %s96 = sphi 0, %s95
      %s110 = sphi 0, %s96
      %s114 = sphi 0, %s114
      %s116 = sphi 0, %s114
      %s117 = sphi 0, %s116
      %s131 = sphi 0, %s117
      %s135 = sphi 0, %s135
      %s137 = sphi 0, %s135
      %s138 = sphi 0, %s137
      %s152 = sphi 0, %s138
      %s156 = sphi 0, %s156
      %s158 = sphi 0, %s156
      %s159 = sphi 0, %s158
      %s173 = sphi 0, %s159
      %s179 = sphi 0, %s181
      %s182 = sphi 0, %s179
      %s183 = sphi 0, %s182
      %s199 = sphi 0, %s183
    $region4: #{tpu_custom_call.1} parent=1 // loop_header_branch
      %20 = sbr.rel (%p18) target = $region8
    $region5: #{tpu_custom_call.1} parent=1 // loop_body
      %s22 = ssub.s32 %s17, 1
      %s23 = ssub.s32 %s17, 2
      %s24 = sadd.s32 %s17, 1
      %s25 = ssub.s32 %s17, %s24
      %p26 = scmp.eq.s32.totalorder %s25, 0
      %s28 = sadd.s32 %s27, 1
      %s29 = scalar_select %p26, %s27, %s28
      %p32 = pneg %p26
      %p33 = scmp.eq.s32.totalorder %s17, 1
      %p34 = por %p32, %p33
      %p35 = scmp.ne.s32.totalorder %s27, %s30
      %p36 = scmp.eq.s32.totalorder %s17, 0
      %p37 = por %p35, %p36
      %p38 = scmp.ne.s32.totalorder %s27, %s30
      %p39 = scmp.eq.s32.totalorder %s22, 1
      %p40 = por %p38, %p39
      %p41 = scmp.ne.s32.totalorder %s30, %s31
      %p42 = scmp.eq.s32.totalorder %s22, 0
      %p43 = por %p41, %p42
      %p44 = scmp.ne.s32.totalorder %s30, %s31
      %p45 = scmp.eq.s32.totalorder %s23, 1
      %p46 = por %p44, %p45
      %p48 = scmp.ne.s32.totalorder %s31, %s47
      %p49 = scmp.eq.s32.totalorder %s23, 0
      %p50 = por %p48, %p49
      %s52 = sadd.s32 %s51, 1
      %p55 = scmp.eq.s32.totalorder %s17, 1
      %p56 = scmp.ne.s32.totalorder %s51, %s53
      %p57 = scmp.eq.s32.totalorder %s17, 0
      %p58 = por %p56, %p57
      %p59 = scmp.ne.s32.totalorder %s51, %s53
      %p60 = scmp.eq.s32.totalorder %s22, 1
      %p61 = por %p59, %p60
      %p62 = scmp.ne.s32.totalorder %s53, %s54
      %p63 = scmp.eq.s32.totalorder %s22, 0
      %p64 = por %p62, %p63
      %p65 = scmp.ne.s32.totalorder %s53, %s54
      %p66 = scmp.eq.s32.totalorder %s23, 1
      %p67 = por %p65, %p66
      %p69 = scmp.ne.s32.totalorder %s54, %s68
      %p70 = scmp.eq.s32.totalorder %s23, 0
      %p71 = por %p69, %p70
      %s73 = sadd.s32 %s72, 1
      %p76 = scmp.eq.s32.totalorder %s17, 1
      %p77 = scmp.ne.s32.totalorder %s72, %s74
      %p78 = scmp.eq.s32.totalorder %s17, 0
      %p79 = por %p77, %p78
      %p80 = scmp.ne.s32.totalorder %s72, %s74
      %p81 = scmp.eq.s32.totalorder %s22, 1
      %p82 = por %p80, %p81
      %p83 = scmp.ne.s32.totalorder %s74, %s75
      %p84 = scmp.eq.s32.totalorder %s22, 0
      %p85 = por %p83, %p84
      %p86 = scmp.ne.s32.totalorder %s74, %s75
      %p87 = scmp.eq.s32.totalorder %s23, 1
      %p88 = por %p86, %p87
      %p90 = scmp.ne.s32.totalorder %s75, %s89
      %p91 = scmp.eq.s32.totalorder %s23, 0
      %p92 = por %p90, %p91
      %s94 = sadd.s32 %s93, 1
      %p97 = scmp.eq.s32.totalorder %s17, 1
      %p98 = scmp.ne.s32.totalorder %s93, %s95
      %p99 = scmp.eq.s32.totalorder %s17, 0
      %p100 = por %p98, %p99
      %p101 = scmp.ne.s32.totalorder %s93, %s95
      %p102 = scmp.eq.s32.totalorder %s22, 1
      %p103 = por %p101, %p102
      %p104 = scmp.ne.s32.totalorder %s95, %s96
      %p105 = scmp.eq.s32.totalorder %s22, 0
      %p106 = por %p104, %p105
      %p107 = scmp.ne.s32.totalorder %s95, %s96
      %p108 = scmp.eq.s32.totalorder %s23, 1
      %p109 = por %p107, %p108
      %p111 = scmp.ne.s32.totalorder %s96, %s110
      %p112 = scmp.eq.s32.totalorder %s23, 0
      %p113 = por %p111, %p112
      %s115 = sadd.s32 %s114, 1
      %p118 = scmp.eq.s32.totalorder %s17, 1
      %p119 = scmp.ne.s32.totalorder %s114, %s116
      %p120 = scmp.eq.s32.totalorder %s17, 0
      %p121 = por %p119, %p120
      %p122 = scmp.ne.s32.totalorder %s114, %s116
      %p123 = scmp.eq.s32.totalorder %s22, 1
      %p124 = por %p122, %p123
      %p125 = scmp.ne.s32.totalorder %s116, %s117
      %p126 = scmp.eq.s32.totalorder %s22, 0
      %p127 = por %p125, %p126
      %p128 = scmp.ne.s32.totalorder %s116, %s117
      %p129 = scmp.eq.s32.totalorder %s23, 1
      %p130 = por %p128, %p129
      %p132 = scmp.ne.s32.totalorder %s117, %s131
      %p133 = scmp.eq.s32.totalorder %s23, 0
      %p134 = por %p132, %p133
      %s136 = sadd.s32 %s135, 1
      %p139 = scmp.eq.s32.totalorder %s17, 1
      %p140 = scmp.ne.s32.totalorder %s135, %s137
      %p141 = scmp.eq.s32.totalorder %s17, 0
      %p142 = por %p140, %p141
      %p143 = scmp.ne.s32.totalorder %s135, %s137
      %p144 = scmp.eq.s32.totalorder %s22, 1
      %p145 = por %p143, %p144
      %p146 = scmp.ne.s32.totalorder %s137, %s138
      %p147 = scmp.eq.s32.totalorder %s22, 0
      %p148 = por %p146, %p147
      %p149 = scmp.ne.s32.totalorder %s137, %s138
      %p150 = scmp.eq.s32.totalorder %s23, 1
      %p151 = por %p149, %p150
      %p153 = scmp.ne.s32.totalorder %s138, %s152
      %p154 = scmp.eq.s32.totalorder %s23, 0
      %p155 = por %p153, %p154
      %s157 = sadd.s32 %s156, 1
      %p160 = scmp.eq.s32.totalorder %s17, 1
      %p161 = scmp.ne.s32.totalorder %s156, %s158
      %p162 = scmp.eq.s32.totalorder %s17, 0
      %p163 = por %p161, %p162
      %p164 = scmp.ne.s32.totalorder %s156, %s158
      %p165 = scmp.eq.s32.totalorder %s22, 1
      %p166 = por %p164, %p165
      %p167 = scmp.ne.s32.totalorder %s158, %s159
      %p168 = scmp.eq.s32.totalorder %s22, 0
      %p169 = por %p167, %p168
      %p170 = scmp.ne.s32.totalorder %s158, %s159
      %p171 = scmp.eq.s32.totalorder %s23, 1
      %p172 = por %p170, %p171
      %p174 = scmp.ne.s32.totalorder %s159, %s173
      %p175 = scmp.eq.s32.totalorder %s23, 0
      %p176 = por %p174, %p175
      %s177 = ssub.s32 %s17, %s24
      %p178 = scmp.eq.s32.totalorder %s177, 0
      %s180 = sadd.s32 %s179, 1
      %s181 = scalar_select %p178, %s179, %s180
      %p184 = pneg %p178
      %p185 = scmp.eq.s32.totalorder %s17, 1
      %p186 = por %p184, %p185
      %p187 = scmp.ne.s32.totalorder %s179, %s182
      %p188 = scmp.eq.s32.totalorder %s17, 0
      %p189 = por %p187, %p188
      %p190 = scmp.ne.s32.totalorder %s179, %s182
      %p191 = scmp.eq.s32.totalorder %s22, 1
      %p192 = por %p190, %p191
      %p193 = scmp.ne.s32.totalorder %s182, %s183
      %p194 = scmp.eq.s32.totalorder %s22, 0
      %p195 = por %p193, %p194
      %p196 = scmp.ne.s32.totalorder %s182, %s183
      %p197 = scmp.eq.s32.totalorder %s23, 1
      %p198 = por %p196, %p197
      %p200 = scmp.ne.s32.totalorder %s183, %s199
      %p201 = scmp.eq.s32.totalorder %s23, 0
      %p202 = por %p200, %p201
      %p203 = scmp.le.s32.totalorder 1, %s17
      %p204 = scmp.lt.s32.totalorder %s17, 3
      %p205 = pnand %p203, %p204
      %p206 = pneg %p205
      // Predicated region
      $region9: #{tpu_custom_call.1} parent=5 // pred_check
        _
      $region10: #{tpu_custom_call.1} parent=5 // pred_check_branch
        %208 = sbr.rel (%p205) target = $region12
      $region11: #{tpu_custom_call.1} parent=5 // pred_region
        %s209 = ssub.s32 %s17, 1
        // Predicated region
        $region13: #{tpu_custom_call.1} parent=11 // pred_check
          %p210 = pneg %p64
        $region14: #{tpu_custom_call.1} parent=11 // pred_check_branch
          %212 = sbr.rel (%p210) target = $region16
        $region15: #{tpu_custom_call.1} parent=11 // pred_region
          _
        $region16: #{tpu_custom_call.1} parent=11 // pred_fallthru
          _
        // Predicated region
        $region17: #{tpu_custom_call.1} parent=11 // pred_check
          %p213 = pneg %p85
        $region18: #{tpu_custom_call.1} parent=11 // pred_check_branch
          %215 = sbr.rel (%p213) target = $region20
        $region19: #{tpu_custom_call.1} parent=11 // pred_region
          _
        $region20: #{tpu_custom_call.1} parent=11 // pred_fallthru
          _
        // Predicated region
        $region21: #{tpu_custom_call.1} parent=11 // pred_check
          %p216 = pneg %p106
        $region22: #{tpu_custom_call.1} parent=11 // pred_check_branch
          %218 = sbr.rel (%p216) target = $region24
        $region23: #{tpu_custom_call.1} parent=11 // pred_region
          _
        $region24: #{tpu_custom_call.1} parent=11 // pred_fallthru
          _
        // Predicated region
        $region25: #{tpu_custom_call.1} parent=11 // pred_check
          %p219 = pneg %p127
        $region26: #{tpu_custom_call.1} parent=11 // pred_check_branch
          %221 = sbr.rel (%p219) target = $region28
        $region27: #{tpu_custom_call.1} parent=11 // pred_region
          _
        $region28: #{tpu_custom_call.1} parent=11 // pred_fallthru
          _
        // Predicated region
        $region29: #{tpu_custom_call.1} parent=11 // pred_check
          %p222 = pneg %p148
        $region30: #{tpu_custom_call.1} parent=11 // pred_check_branch
          %224 = sbr.rel (%p222) target = $region32
        $region31: #{tpu_custom_call.1} parent=11 // pred_region
          _
        $region32: #{tpu_custom_call.1} parent=11 // pred_fallthru
          _
        // Predicated region
        $region33: #{tpu_custom_call.1} parent=11 // pred_check
          %p225 = pneg %p169
        $region34: #{tpu_custom_call.1} parent=11 // pred_check_branch
          %227 = sbr.rel (%p225) target = $region36
        $region35: #{tpu_custom_call.1} parent=11 // pred_region
          _
        $region36: #{tpu_custom_call.1} parent=11 // pred_fallthru
          _
      $region12: #{tpu_custom_call.1} parent=5 // pred_fallthru
        _
      %p228 = scmp.lt.s32.totalorder %s17, 2
      // Predicated region
      $region37: #{tpu_custom_call.1} parent=5 // pred_check
        %p229 = pneg %p228
      $region38: #{tpu_custom_call.1} parent=5 // pred_check_branch
        %231 = sbr.rel (%p229) target = $region40
      $region39: #{tpu_custom_call.1} parent=5 // pred_region
        // Predicated region
        $region41: #{tpu_custom_call.1} parent=39 // pred_check
          %p232 = pneg %p37
        $region42: #{tpu_custom_call.1} parent=39 // pred_check_branch
          %234 = sbr.rel (%p232) target = $region44
        $region43: #{tpu_custom_call.1} parent=39 // pred_region
          %s235 = smul.u32 64, %s17
          %p236 = scmp.lt.s32.totalorder %s235, 127
          %s237 = scalar_select %p236, %s235, 127
          %s238 = smul.addr %s237, 4
          %s239 = scalar_lea.vmem %s0, %s238
          %s240 = smul.u32 64, %s17
        $region44: #{tpu_custom_call.1} parent=39 // pred_fallthru
          _
      $region40: #{tpu_custom_call.1} parent=5 // pred_fallthru
        _
      %p241 = scmp.le.s32.totalorder 1, %s17
      %p242 = scmp.lt.s32.totalorder %s17, 3
      %p243 = pnand %p241, %p242
      %p244 = pneg %p243
      // Predicated region
      $region45: #{tpu_custom_call.1} parent=5 // pred_check
        _
      $region46: #{tpu_custom_call.1} parent=5 // pred_check_branch
        %246 = sbr.rel (%p243) target = $region48
      $region47: #{tpu_custom_call.1} parent=5 // pred_region
        %s247 = ssub.s32 %s17, 1
        %s248 = smul.u32 64, %s22
        %p249 = scmp.lt.s32.totalorder %s248, 127
        %s250 = scalar_select %p249, %s248, 127
        %s251 = smul.addr %s250, 4
        %s252 = scalar_lea.vmem %s0, %s251
        %p253 = pneg %p43
        %p254 = pneg %p40
        %p255 = pneg %p64
        %p256 = pneg %p61
        %p257 = pneg %p85
        %p258 = pneg %p82
        %p259 = pneg %p106
        %p260 = pneg %p103
        %p261 = pneg %p127
        %p262 = pneg %p124
        %p263 = pneg %p148
        %p264 = pneg %p145
        %p265 = pneg %p169
        %p266 = pneg %p166
        %p267 = pneg %p195
        %p268 = pneg %p192
        %s269 = sand.u32 %s182, 1
        %s270 = scalar_lea.sflag [#allocation4], %s269
        %s271 = sand.u32 %s182, 1
        %s272 = smul.addr %s271, 4
        %s273 = scalar_lea.vmem [#allocation3], %s272
        %s274 = smul.u32 64, %s22
        %p275 = scmp.lt.s32.totalorder %s274, 127
        %s276 = scalar_select %p275, %s274, 127
        %s277 = smul.addr %s276, 4
        %s278 = scalar_lea.vmem %s0, %s277
        %s279 = smul.u32 64, %s22
        %s280 = smul.u32 4, %s22
        %v282 = vld [vmem:[%s278] sm:$0xf]
        %v283 = vld [vmem:[%s278 + $0x4] sm:$0xf]
        %v284 = vld [vmem:[%s278 + $0x8] sm:$0xf]
        %v285 = vld [vmem:[%s278 + $0xc] sm:$0xf]
        %v286 = vld [vmem:[%s278 + $0x10] sm:$0xf]
        %v287 = vld [vmem:[%s278 + $0x14] sm:$0xf]
        %v288 = vld [vmem:[%s278 + $0x18] sm:$0xf]
        %v289 = vld [vmem:[%s278 + $0x1c] sm:$0xf]
        %v290 = vld [vmem:[%s278 + $0x20] sm:$0xf]
        %v291 = vld [vmem:[%s278 + $0x24] sm:$0xf]
        %v292 = vld [vmem:[%s278 + $0x28] sm:$0xf]
        %v293 = vld [vmem:[%s278 + $0x2c] sm:$0xf]
        %v294 = vld [vmem:[%s278 + $0x30] sm:$0xf]
        %v295 = vld [vmem:[%s278 + $0x34] sm:$0xf]
        %v296 = vld [vmem:[%s278 + $0x38] sm:$0xf]
        %v297 = vld [vmem:[%s278 + $0x3c] sm:$0xf]
        %v298 = vld [vmem:[%s278 + $0x40] sm:$0xf]
        %v299 = vld [vmem:[%s278 + $0x44] sm:$0xf]
        %v300 = vld [vmem:[%s278 + $0x48] sm:$0xf]
        %v301 = vld [vmem:[%s278 + $0x4c] sm:$0xf]
        %v302 = vld [vmem:[%s278 + $0x50] sm:$0xf]
        %v303 = vld [vmem:[%s278 + $0x54] sm:$0xf]
        %v304 = vld [vmem:[%s278 + $0x58] sm:$0xf]
        %v305 = vld [vmem:[%s278 + $0x5c] sm:$0xf]
        %v306 = vld [vmem:[%s278 + $0x60] sm:$0xf]
        %v307 = vld [vmem:[%s278 + $0x64] sm:$0xf]
        %v308 = vld [vmem:[%s278 + $0x68] sm:$0xf]
        %v309 = vld [vmem:[%s278 + $0x6c] sm:$0xf]
        %v310 = vld [vmem:[%s278 + $0x70] sm:$0xf]
        %v311 = vld [vmem:[%s278 + $0x74] sm:$0xf]
        %v312 = vld [vmem:[%s278 + $0x78] sm:$0xf]
        %v313 = vld [vmem:[%s278 + $0x7c] sm:$0xf]
        %v314 = vld [vmem:[%s278 + $0x80] sm:$0xf]
        %v315 = vld [vmem:[%s278 + $0x84] sm:$0xf]
        %v316 = vld [vmem:[%s278 + $0x88] sm:$0xf]
        %v317 = vld [vmem:[%s278 + $0x8c] sm:$0xf]
        %v318 = vld [vmem:[%s278 + $0x90] sm:$0xf]
        %v319 = vld [vmem:[%s278 + $0x94] sm:$0xf]
        %v320 = vld [vmem:[%s278 + $0x98] sm:$0xf]
        %v321 = vld [vmem:[%s278 + $0x9c] sm:$0xf]
        %v322 = vld [vmem:[%s278 + $0xa0] sm:$0xf]
        %v323 = vld [vmem:[%s278 + $0xa4] sm:$0xf]
        %v324 = vld [vmem:[%s278 + $0xa8] sm:$0xf]
        %v325 = vld [vmem:[%s278 + $0xac] sm:$0xf]
        %v326 = vld [vmem:[%s278 + $0xb0] sm:$0xf]
        %v327 = vld [vmem:[%s278 + $0xb4] sm:$0xf]
        %v328 = vld [vmem:[%s278 + $0xb8] sm:$0xf]
        %v329 = vld [vmem:[%s278 + $0xbc] sm:$0xf]
        %v330 = vld [vmem:[%s278 + $0xc0] sm:$0xf]
        %v331 = vld [vmem:[%s278 + $0xc4] sm:$0xf]
        %v332 = vld [vmem:[%s278 + $0xc8] sm:$0xf]
        %v333 = vld [vmem:[%s278 + $0xcc] sm:$0xf]
        %v334 = vld [vmem:[%s278 + $0xd0] sm:$0xf]
        %v335 = vld [vmem:[%s278 + $0xd4] sm:$0xf]
        %v336 = vld [vmem:[%s278 + $0xd8] sm:$0xf]
        %v337 = vld [vmem:[%s278 + $0xdc] sm:$0xf]
        %v338 = vld [vmem:[%s278 + $0xe0] sm:$0xf]
        %v339 = vld [vmem:[%s278 + $0xe4] sm:$0xf]
        %v340 = vld [vmem:[%s278 + $0xe8] sm:$0xf]
        %v341 = vld [vmem:[%s278 + $0xec] sm:$0xf]
        %v342 = vld [vmem:[%s278 + $0xf0] sm:$0xf]
        %v343 = vld [vmem:[%s278 + $0xf4] sm:$0xf]
        %v344 = vld [vmem:[%s278 + $0xf8] sm:$0xf]
        %v345 = vld [vmem:[%s278 + $0xfc] sm:$0xf]
        %v346 = vld [vmem:[%s1] sm:$0xf]
        %v347 = vld [vmem:[%s1 + $0x4] sm:$0xf]
        %v348 = vld [vmem:[%s2] sm:$0x1]
        %v350 = vlaneseq
        %v351 = vshrl.u32 %v350, 7
        %v352 = vsub.s32 0, %v351
        %v353 = vrot.slane %v348, %v352
        %v419 = vunpack.c.l.b16 %v282
        %v420 = vunpack.c.l.b16 %v283
        %v421 = vunpack.c.l.b16 %v284
        %v422 = vunpack.c.l.b16 %v285
        %v423 = vunpack.c.l.b16 %v286
        %v424 = vunpack.c.l.b16 %v287
        %v425 = vunpack.c.l.b16 %v288
        %v426 = vunpack.c.l.b16 %v289
        %v427 = vunpack.c.l.b16 %v290
        %v428 = vunpack.c.l.b16 %v291
        %v429 = vunpack.c.l.b16 %v292
        %v430 = vunpack.c.l.b16 %v293
        %v431 = vunpack.c.l.b16 %v294
        %v432 = vunpack.c.l.b16 %v295
        %v433 = vunpack.c.l.b16 %v296
        %v434 = vunpack.c.l.b16 %v297
        %v435 = vunpack.c.l.b16 %v298
        %v436 = vunpack.c.l.b16 %v299
        %v437 = vunpack.c.l.b16 %v300
        %v438 = vunpack.c.l.b16 %v301
        %v439 = vunpack.c.l.b16 %v302
        %v440 = vunpack.c.l.b16 %v303
        %v441 = vunpack.c.l.b16 %v304
        %v442 = vunpack.c.l.b16 %v305
        %v443 = vunpack.c.l.b16 %v306
        %v444 = vunpack.c.l.b16 %v307
        %v445 = vunpack.c.l.b16 %v308
        %v446 = vunpack.c.l.b16 %v309
        %v447 = vunpack.c.l.b16 %v310
        %v448 = vunpack.c.l.b16 %v311
        %v449 = vunpack.c.l.b16 %v312
        %v450 = vunpack.c.l.b16 %v313
        %v451 = vunpack.c.l.b16 %v314
        %v452 = vunpack.c.l.b16 %v315
        %v453 = vunpack.c.l.b16 %v316
        %v454 = vunpack.c.l.b16 %v317
        %v455 = vunpack.c.l.b16 %v318
        %v456 = vunpack.c.l.b16 %v319
        %v457 = vunpack.c.l.b16 %v320
        %v458 = vunpack.c.l.b16 %v321
        %v459 = vunpack.c.l.b16 %v322
        %v460 = vunpack.c.l.b16 %v323
        %v461 = vunpack.c.l.b16 %v324
        %v462 = vunpack.c.l.b16 %v325
        %v463 = vunpack.c.l.b16 %v326
        %v464 = vunpack.c.l.b16 %v327
        %v465 = vunpack.c.l.b16 %v328
        %v466 = vunpack.c.l.b16 %v329
        %v467 = vunpack.c.l.b16 %v330
        %v468 = vunpack.c.l.b16 %v331
        %v469 = vunpack.c.l.b16 %v332
        %v470 = vunpack.c.l.b16 %v333
        %v471 = vunpack.c.l.b16 %v334
        %v472 = vunpack.c.l.b16 %v335
        %v473 = vunpack.c.l.b16 %v336
        %v474 = vunpack.c.l.b16 %v337
        %v475 = vunpack.c.l.b16 %v338
        %v476 = vunpack.c.l.b16 %v339
        %v477 = vunpack.c.l.b16 %v340
        %v478 = vunpack.c.l.b16 %v341
        %v479 = vunpack.c.l.b16 %v342
        %v480 = vunpack.c.l.b16 %v343
        %v481 = vunpack.c.l.b16 %v344
        %v482 = vunpack.c.l.b16 %v345
        %v483 = vpack.c.b16 %v420, %v419
        %v484 = vpack.c.b16 %v422, %v421
        %v485 = vpack.c.b16 %v424, %v423
        %v486 = vpack.c.b16 %v426, %v425
        %v487 = vpack.c.b16 %v428, %v427
        %v488 = vpack.c.b16 %v430, %v429
        %v489 = vpack.c.b16 %v432, %v431
        %v490 = vpack.c.b16 %v434, %v433
        %v491 = vpack.c.b16 %v436, %v435
        %v492 = vpack.c.b16 %v438, %v437
        %v493 = vpack.c.b16 %v440, %v439
        %v494 = vpack.c.b16 %v442, %v441
        %v495 = vpack.c.b16 %v444, %v443
        %v496 = vpack.c.b16 %v446, %v445
        %v497 = vpack.c.b16 %v448, %v447
        %v498 = vpack.c.b16 %v450, %v449
        %v499 = vpack.c.b16 %v452, %v451
        %v500 = vpack.c.b16 %v454, %v453
        %v501 = vpack.c.b16 %v456, %v455
        %v502 = vpack.c.b16 %v458, %v457
        %v503 = vpack.c.b16 %v460, %v459
        %v504 = vpack.c.b16 %v462, %v461
        %v505 = vpack.c.b16 %v464, %v463
        %v506 = vpack.c.b16 %v466, %v465
        %v507 = vpack.c.b16 %v468, %v467
        %v508 = vpack.c.b16 %v470, %v469
        %v509 = vpack.c.b16 %v472, %v471
        %v510 = vpack.c.b16 %v474, %v473
        %v511 = vpack.c.b16 %v476, %v475
        %v512 = vpack.c.b16 %v478, %v477
        %v513 = vpack.c.b16 %v480, %v479
        %v514 = vpack.c.b16 %v482, %v481
        %v517 = vunpack.c.l.b16 %v346
        %v518 = vunpack.c.l.b16 %v347
        %v519 = vpack.c.b16 %v518, %v517
        %vm521 = vcmask 130048
        %v523 = vsel %vm521, %v483, 0
        %v526 = vsel %vm521, %v484, 0
        %v529 = vsel %vm521, %v485, 0
        %v532 = vsel %vm521, %v486, 0
        %v535 = vsel %vm521, %v487, 0
        %v538 = vsel %vm521, %v488, 0
        %v541 = vsel %vm521, %v489, 0
        %v544 = vsel %vm521, %v490, 0
        %v547 = vsel %vm521, %v491, 0
        %v550 = vsel %vm521, %v492, 0
        %v553 = vsel %vm521, %v493, 0
        %v556 = vsel %vm521, %v494, 0
        %v559 = vsel %vm521, %v495, 0
        %v562 = vsel %vm521, %v496, 0
        %v565 = vsel %vm521, %v497, 0
        %v568 = vsel %vm521, %v498, 0
        %v571 = vsel %vm521, %v499, 0
        %v574 = vsel %vm521, %v500, 0
        %v577 = vsel %vm521, %v501, 0
        %v580 = vsel %vm521, %v502, 0
        %v583 = vsel %vm521, %v503, 0
        %v586 = vsel %vm521, %v504, 0
        %v589 = vsel %vm521, %v505, 0
        %v592 = vsel %vm521, %v506, 0
        %v595 = vsel %vm521, %v507, 0
        %v598 = vsel %vm521, %v508, 0
        %v601 = vsel %vm521, %v509, 0
        %v604 = vsel %vm521, %v510, 0
        %v607 = vsel %vm521, %v511, 0
        %v610 = vsel %vm521, %v512, 0
        %v613 = vsel %vm521, %v513, 0
        %v616 = vsel %vm521, %v514, 0
        %618 = vmatprep.subr.bf16.mxu0 0
        %619 = vmatpush1.bf16.msra.mxu0 %v519
        %620 = vmatprep.subr.bf16.mxu0 0
        %621 = vmatpush1.bf16.msra.mxu0 0
        %622 = vmatprep.subr.bf16.mxu0 0
        %623 = vmatpush1.bf16.msra.mxu0 0
        %624 = vmatprep.subr.bf16.mxu0 0
        %625 = vmatpush1.bf16.msra.mxu0 0
        %626 = vmatprep.subr.bf16.mxu0 0
        %627 = vmatpush1.bf16.msra.mxu0 0
        %628 = vmatprep.subr.bf16.mxu0 0
        %629 = vmatpush1.bf16.msra.mxu0 0
        %630 = vmatprep.subr.bf16.mxu0 0
        %631 = vmatpush1.bf16.msra.mxu0 0
        %632 = vmatprep.subr.bf16.mxu0 0
        %633 = vmatpush1.bf16.msra.mxu0 0
        %634 = vmatprep.subr.bf16.mxu0 0
        %635 = vmatpush1.bf16.msra.mxu0 0
        %636 = vmatprep.subr.bf16.mxu0 0
        %637 = vmatpush1.bf16.msra.mxu0 0
        %638 = vmatprep.subr.bf16.mxu0 0
        %639 = vmatpush1.bf16.msra.mxu0 0
        %640 = vmatprep.subr.bf16.mxu0 0
        %641 = vmatpush1.bf16.msra.mxu0 0
        %642 = vmatprep.subr.bf16.mxu0 0
        %643 = vmatpush1.bf16.msra.mxu0 0
        %644 = vmatprep.subr.bf16.mxu0 0
        %645 = vmatpush1.bf16.msra.mxu0 0
        %646 = vmatprep.subr.bf16.mxu0 0
        %647 = vmatpush1.bf16.msra.mxu0 0
        %648 = vmatprep.subr.bf16.mxu0 0
        %649 = vmatpush1.bf16.msra.mxu0 0
        %650 = vmatprep.mubr.bf16.mxu0 0
        %651 = vmatmul.mubr.bf16.gmra.mrb[0].mxu0 %v523
        %v652 = vpop.f32.mrb[0].mxu0
        %v653 = vadd.f32 %v353, %v652
        %v654 = vpop.f32.mrb[0].mxu0
        %v655 = vpop.f32.mrb[0].mxu0
        %v656 = vadd.f32 %v353, %v655
        %v657 = vpop.f32.mrb[0].mxu0
        %658 = vmatprep.mubr.bf16.mxu0 0
        %659 = vmatmul.mubr.bf16.gmra.mrb[0].mxu0 %v526
        %v660 = vpop.f32.mrb[0].mxu0
        %v661 = vadd.f32 %v353, %v660
        %v662 = vpop.f32.mrb[0].mxu0
        %v663 = vpop.f32.mrb[0].mxu0
        %v664 = vadd.f32 %v353, %v663
        %v665 = vpop.f32.mrb[0].mxu0
        %666 = vmatprep.mubr.bf16.mxu0 0
        %667 = vmatmul.mubr.bf16.gmra.mrb[0].mxu0 %v529
        %v668 = vpop.f32.mrb[0].mxu0
        %v669 = vadd.f32 %v353, %v668
        %v670 = vpop.f32.mrb[0].mxu0
        %v671 = vpop.f32.mrb[0].mxu0
        %v672 = vadd.f32 %v353, %v671
        %v673 = vpop.f32.mrb[0].mxu0
        %674 = vmatprep.mubr.bf16.mxu0 0
        %675 = vmatmul.mubr.bf16.gmra.mrb[0].mxu0 %v532
        %v676 = vpop.f32.mrb[0].mxu0
        %v677 = vadd.f32 %v353, %v676
        %v678 = vpop.f32.mrb[0].mxu0
        %v679 = vpop.f32.mrb[0].mxu0
        %v680 = vadd.f32 %v353, %v679
        %v681 = vpop.f32.mrb[0].mxu0
        %682 = vmatprep.mubr.bf16.mxu0 0
        %683 = vmatmul.mubr.bf16.gmra.mrb[0].mxu0 %v535
        %v684 = vpop.f32.mrb[0].mxu0
        %v685 = vadd.f32 %v353, %v684
        %v686 = vpop.f32.mrb[0].mxu0
        %v687 = vpop.f32.mrb[0].mxu0
        %v688 = vadd.f32 %v353, %v687
        %v689 = vpop.f32.mrb[0].mxu0
        %690 = vmatprep.mubr.bf16.mxu0 0
        %691 = vmatmul.mubr.bf16.gmra.mrb[0].mxu0 %v538
        %v692 = vpop.f32.mrb[0].mxu0
        %v693 = vadd.f32 %v353, %v692
        %v694 = vpop.f32.mrb[0].mxu0
        %v695 = vpop.f32.mrb[0].mxu0
        %v696 = vadd.f32 %v353, %v695
        %v697 = vpop.f32.mrb[0].mxu0
        %698 = vmatprep.mubr.bf16.mxu0 0
        %699 = vmatmul.mubr.bf16.gmra.mrb[0].mxu0 %v541
        %v700 = vpop.f32.mrb[0].mxu0
        %v701 = vadd.f32 %v353, %v700
        %v702 = vpop.f32.mrb[0].mxu0
        %v703 = vpop.f32.mrb[0].mxu0
        %v704 = vadd.f32 %v353, %v703
        %v705 = vpop.f32.mrb[0].mxu0
        %706 = vmatprep.mubr.bf16.mxu0 0
        %707 = vmatmul.mubr.bf16.gmra.mrb[0].mxu0 %v544
        %v708 = vpop.f32.mrb[0].mxu0
        %v709 = vadd.f32 %v353, %v708
        %v710 = vpop.f32.mrb[0].mxu0
        %v711 = vpop.f32.mrb[0].mxu0
        %v712 = vadd.f32 %v353, %v711
        %v713 = vpop.f32.mrb[0].mxu0
        %714 = vmatprep.mubr.bf16.mxu0 0
        %715 = vmatmul.mubr.bf16.gmra.mrb[0].mxu0 %v547
        %v716 = vpop.f32.mrb[0].mxu0
        %v717 = vadd.f32 %v353, %v716
        %v718 = vpop.f32.mrb[0].mxu0
        %v719 = vpop.f32.mrb[0].mxu0
        %v720 = vadd.f32 %v353, %v719
        %v721 = vpop.f32.mrb[0].mxu0
        %722 = vmatprep.mubr.bf16.mxu0 0
        %723 = vmatmul.mubr.bf16.gmra.mrb[0].mxu0 %v550
        %v724 = vpop.f32.mrb[0].mxu0
        %v725 = vadd.f32 %v353, %v724
        %v726 = vpop.f32.mrb[0].mxu0
        %v727 = vpop.f32.mrb[0].mxu0
        %v728 = vadd.f32 %v353, %v727
        %v729 = vpop.f32.mrb[0].mxu0
        %730 = vmatprep.mubr.bf16.mxu0 0
        %731 = vmatmul.mubr.bf16.gmra.mrb[0].mxu0 %v553
        %v732 = vpop.f32.mrb[0].mxu0
        %v733 = vadd.f32 %v353, %v732
        %v734 = vpop.f32.mrb[0].mxu0
        %v735 = vpop.f32.mrb[0].mxu0
        %v736 = vadd.f32 %v353, %v735
        %v737 = vpop.f32.mrb[0].mxu0
        %738 = vmatprep.mubr.bf16.mxu0 0
        %739 = vmatmul.mubr.bf16.gmra.mrb[0].mxu0 %v556
        %v740 = vpop.f32.mrb[0].mxu0
        %v741 = vadd.f32 %v353, %v740
        %v742 = vpop.f32.mrb[0].mxu0
        %v743 = vpop.f32.mrb[0].mxu0
        %v744 = vadd.f32 %v353, %v743
        %v745 = vpop.f32.mrb[0].mxu0
        %746 = vmatprep.mubr.bf16.mxu0 0
        %747 = vmatmul.mubr.bf16.gmra.mrb[0].mxu0 %v559
        %v748 = vpop.f32.mrb[0].mxu0
        %v749 = vadd.f32 %v353, %v748
        %v750 = vpop.f32.mrb[0].mxu0
        %v751 = vpop.f32.mrb[0].mxu0
        %v752 = vadd.f32 %v353, %v751
        %v753 = vpop.f32.mrb[0].mxu0
        %754 = vmatprep.mubr.bf16.mxu0 0
        %755 = vmatmul.mubr.bf16.gmra.mrb[0].mxu0 %v562
        %v756 = vpop.f32.mrb[0].mxu0
        %v757 = vadd.f32 %v353, %v756
        %v758 = vpop.f32.mrb[0].mxu0
        %v759 = vpop.f32.mrb[0].mxu0
        %v760 = vadd.f32 %v353, %v759
        %v761 = vpop.f32.mrb[0].mxu0
        %762 = vmatprep.mubr.bf16.mxu0 0
        %763 = vmatmul.mubr.bf16.gmra.mrb[0].mxu0 %v565
        %v764 = vpop.f32.mrb[0].mxu0
        %v765 = vadd.f32 %v353, %v764
        %v766 = vpop.f32.mrb[0].mxu0
        %v767 = vpop.f32.mrb[0].mxu0
        %v768 = vadd.f32 %v353, %v767
        %v769 = vpop.f32.mrb[0].mxu0
        %770 = vmatprep.mubr.bf16.mxu0 0
        %771 = vmatmul.mubr.bf16.gmra.mrb[0].mxu0 %v568
        %v772 = vpop.f32.mrb[0].mxu0
        %v773 = vadd.f32 %v353, %v772
        %v774 = vpop.f32.mrb[0].mxu0
        %v775 = vpop.f32.mrb[0].mxu0
        %v776 = vadd.f32 %v353, %v775
        %v777 = vpop.f32.mrb[0].mxu0
        %778 = vmatprep.mubr.bf16.mxu0 0
        %779 = vmatmul.mubr.bf16.gmra.mrb[0].mxu0 %v571
        %v780 = vpop.f32.mrb[0].mxu0
        %v781 = vadd.f32 %v353, %v780
        %v782 = vpop.f32.mrb[0].mxu0
        %v783 = vpop.f32.mrb[0].mxu0
        %v784 = vadd.f32 %v353, %v783
        %v785 = vpop.f32.mrb[0].mxu0
        %786 = vmatprep.mubr.bf16.mxu0 0
        %787 = vmatmul.mubr.bf16.gmra.mrb[0].mxu0 %v574
        %v788 = vpop.f32.mrb[0].mxu0
        %v789 = vadd.f32 %v353, %v788
        %v790 = vpop.f32.mrb[0].mxu0
        %v791 = vpop.f32.mrb[0].mxu0
        %v792 = vadd.f32 %v353, %v791
        %v793 = vpop.f32.mrb[0].mxu0
        %794 = vmatprep.mubr.bf16.mxu0 0
        %795 = vmatmul.mubr.bf16.gmra.mrb[0].mxu0 %v577
        %v796 = vpop.f32.mrb[0].mxu0
        %v797 = vadd.f32 %v353, %v796
        %v798 = vpop.f32.mrb[0].mxu0
        %v799 = vpop.f32.mrb[0].mxu0
        %v800 = vadd.f32 %v353, %v799
        %v801 = vpop.f32.mrb[0].mxu0
        %802 = vmatprep.mubr.bf16.mxu0 0
        %803 = vmatmul.mubr.bf16.gmra.mrb[0].mxu0 %v580
        %v804 = vpop.f32.mrb[0].mxu0
        %v805 = vadd.f32 %v353, %v804
        %v806 = vpop.f32.mrb[0].mxu0
        %v807 = vpop.f32.mrb[0].mxu0
        %v808 = vadd.f32 %v353, %v807
        %v809 = vpop.f32.mrb[0].mxu0
        %810 = vmatprep.mubr.bf16.mxu0 0
        %811 = vmatmul.mubr.bf16.gmra.mrb[0].mxu0 %v583
        %v812 = vpop.f32.mrb[0].mxu0
        %v813 = vadd.f32 %v353, %v812
        %v814 = vpop.f32.mrb[0].mxu0
        %v815 = vpop.f32.mrb[0].mxu0
        %v816 = vadd.f32 %v353, %v815
        %v817 = vpop.f32.mrb[0].mxu0
        %818 = vmatprep.mubr.bf16.mxu0 0
        %819 = vmatmul.mubr.bf16.gmra.mrb[0].mxu0 %v586
        %v820 = vpop.f32.mrb[0].mxu0
        %v821 = vadd.f32 %v353, %v820
        %v822 = vpop.f32.mrb[0].mxu0
        %v823 = vpop.f32.mrb[0].mxu0
        %v824 = vadd.f32 %v353, %v823
        %v825 = vpop.f32.mrb[0].mxu0
        %826 = vmatprep.mubr.bf16.mxu0 0
        %827 = vmatmul.mubr.bf16.gmra.mrb[0].mxu0 %v589
        %v828 = vpop.f32.mrb[0].mxu0
        %v829 = vadd.f32 %v353, %v828
        %v830 = vpop.f32.mrb[0].mxu0
        %v831 = vpop.f32.mrb[0].mxu0
        %v832 = vadd.f32 %v353, %v831
        %v833 = vpop.f32.mrb[0].mxu0
        %834 = vmatprep.mubr.bf16.mxu0 0
        %835 = vmatmul.mubr.bf16.gmra.mrb[0].mxu0 %v592
        %v836 = vpop.f32.mrb[0].mxu0
        %v837 = vadd.f32 %v353, %v836
        %v838 = vpop.f32.mrb[0].mxu0
        %v839 = vpop.f32.mrb[0].mxu0
        %v840 = vadd.f32 %v353, %v839
        %v841 = vpop.f32.mrb[0].mxu0
        %842 = vmatprep.mubr.bf16.mxu0 0
        %843 = vmatmul.mubr.bf16.gmra.mrb[0].mxu0 %v595
        %v844 = vpop.f32.mrb[0].mxu0
        %v845 = vadd.f32 %v353, %v844
        %v846 = vpop.f32.mrb[0].mxu0
        %v847 = vpop.f32.mrb[0].mxu0
        %v848 = vadd.f32 %v353, %v847
        %v849 = vpop.f32.mrb[0].mxu0
        %850 = vmatprep.mubr.bf16.mxu0 0
        %851 = vmatmul.mubr.bf16.gmra.mrb[0].mxu0 %v598
        %v852 = vpop.f32.mrb[0].mxu0
        %v853 = vadd.f32 %v353, %v852
        %v854 = vpop.f32.mrb[0].mxu0
        %v855 = vpop.f32.mrb[0].mxu0
        %v856 = vadd.f32 %v353, %v855
        %v857 = vpop.f32.mrb[0].mxu0
        %858 = vmatprep.mubr.bf16.mxu0 0
        %859 = vmatmul.mubr.bf16.gmra.mrb[0].mxu0 %v601
        %v860 = vpop.f32.mrb[0].mxu0
        %v861 = vadd.f32 %v353, %v860
        %v862 = vpop.f32.mrb[0].mxu0
        %v863 = vpop.f32.mrb[0].mxu0
        %v864 = vadd.f32 %v353, %v863
        %v865 = vpop.f32.mrb[0].mxu0
        %866 = vmatprep.mubr.bf16.mxu0 0
        %867 = vmatmul.mubr.bf16.gmra.mrb[0].mxu0 %v604
        %v868 = vpop.f32.mrb[0].mxu0
        %v869 = vadd.f32 %v353, %v868
        %v870 = vpop.f32.mrb[0].mxu0
        %v871 = vpop.f32.mrb[0].mxu0
        %v872 = vadd.f32 %v353, %v871
        %v873 = vpop.f32.mrb[0].mxu0
        %874 = vmatprep.mubr.bf16.mxu0 0
        %875 = vmatmul.mubr.bf16.gmra.mrb[0].mxu0 %v607
        %v876 = vpop.f32.mrb[0].mxu0
        %v877 = vadd.f32 %v353, %v876
        %v878 = vpop.f32.mrb[0].mxu0
        %v879 = vpop.f32.mrb[0].mxu0
        %v880 = vadd.f32 %v353, %v879
        %v881 = vpop.f32.mrb[0].mxu0
        %882 = vmatprep.mubr.bf16.mxu0 0
        %883 = vmatmul.mubr.bf16.gmra.mrb[0].mxu0 %v610
        %v884 = vpop.f32.mrb[0].mxu0
        %v885 = vadd.f32 %v353, %v884
        %v886 = vpop.f32.mrb[0].mxu0
        %v887 = vpop.f32.mrb[0].mxu0
        %v888 = vadd.f32 %v353, %v887
        %v889 = vpop.f32.mrb[0].mxu0
        %890 = vmatprep.mubr.bf16.mxu0 0
        %891 = vmatmul.mubr.bf16.gmra.mrb[0].mxu0 %v613
        %v892 = vpop.f32.mrb[0].mxu0
        %v893 = vadd.f32 %v353, %v892
        %v894 = vpop.f32.mrb[0].mxu0
        %v895 = vpop.f32.mrb[0].mxu0
        %v896 = vadd.f32 %v353, %v895
        %v897 = vpop.f32.mrb[0].mxu0
        %898 = vmatprep.mubr.bf16.mxu0 0
        %899 = vmatmul.mubr.bf16.gmra.mrb[0].mxu0 %v616
        %v900 = vpop.f32.mrb[0].mxu0
        %v901 = vadd.f32 %v353, %v900
        %v902 = vpop.f32.mrb[0].mxu0
        %v903 = vpop.f32.mrb[0].mxu0
        %v904 = vadd.f32 %v353, %v903
        %v905 = vpop.f32.mrb[0].mxu0
        %906 = vdwg.mxu0
        %v907 = vmax.f32 %v653, 0.0
        %v908 = vmax.f32 %v656, 0.0
        %v909 = vmax.f32 %v661, 0.0
        %v910 = vmax.f32 %v664, 0.0
        %v911 = vmax.f32 %v669, 0.0
        %v912 = vmax.f32 %v672, 0.0
        %v913 = vmax.f32 %v677, 0.0
        %v914 = vmax.f32 %v680, 0.0
        %v915 = vmax.f32 %v685, 0.0
        %v916 = vmax.f32 %v688, 0.0
        %v917 = vmax.f32 %v693, 0.0
        %v918 = vmax.f32 %v696, 0.0
        %v919 = vmax.f32 %v701, 0.0
        %v920 = vmax.f32 %v704, 0.0
        %v921 = vmax.f32 %v709, 0.0
        %v922 = vmax.f32 %v712, 0.0
        %v923 = vmax.f32 %v717, 0.0
        %v924 = vmax.f32 %v720, 0.0
        %v925 = vmax.f32 %v725, 0.0
        %v926 = vmax.f32 %v728, 0.0
        %v927 = vmax.f32 %v733, 0.0
        %v928 = vmax.f32 %v736, 0.0
        %v929 = vmax.f32 %v741, 0.0
        %v930 = vmax.f32 %v744, 0.0
        %v931 = vmax.f32 %v749, 0.0
        %v932 = vmax.f32 %v752, 0.0
        %v933 = vmax.f32 %v757, 0.0
        %v934 = vmax.f32 %v760, 0.0
        %v935 = vmax.f32 %v765, 0.0
        %v936 = vmax.f32 %v768, 0.0
        %v937 = vmax.f32 %v773, 0.0
        %v938 = vmax.f32 %v776, 0.0
        %v939 = vmax.f32 %v781, 0.0
        %v940 = vmax.f32 %v784, 0.0
        %v941 = vmax.f32 %v789, 0.0
        %v942 = vmax.f32 %v792, 0.0
        %v943 = vmax.f32 %v797, 0.0
        %v944 = vmax.f32 %v800, 0.0
        %v945 = vmax.f32 %v805, 0.0
        %v946 = vmax.f32 %v808, 0.0
        %v947 = vmax.f32 %v813, 0.0
        %v948 = vmax.f32 %v816, 0.0
        %v949 = vmax.f32 %v821, 0.0
        %v950 = vmax.f32 %v824, 0.0
        %v951 = vmax.f32 %v829, 0.0
        %v952 = vmax.f32 %v832, 0.0
        %v953 = vmax.f32 %v837, 0.0
        %v954 = vmax.f32 %v840, 0.0
        %v955 = vmax.f32 %v845, 0.0
        %v956 = vmax.f32 %v848, 0.0
        %v957 = vmax.f32 %v853, 0.0
        %v958 = vmax.f32 %v856, 0.0
        %v959 = vmax.f32 %v861, 0.0
        %v960 = vmax.f32 %v864, 0.0
        %v961 = vmax.f32 %v869, 0.0
        %v962 = vmax.f32 %v872, 0.0
        %v963 = vmax.f32 %v877, 0.0
        %v964 = vmax.f32 %v880, 0.0
        %v965 = vmax.f32 %v885, 0.0
        %v966 = vmax.f32 %v888, 0.0
        %v967 = vmax.f32 %v893, 0.0
        %v968 = vmax.f32 %v896, 0.0
        %v969 = vmax.f32 %v901, 0.0
        %v970 = vmax.f32 %v904, 0.0
        %v971 = vpack.c.bf16 %v908, %v907
        %v972 = vpack.c.bf16 %v910, %v909
        %v973 = vpack.c.bf16 %v912, %v911
        %v974 = vpack.c.bf16 %v914, %v913
        %v975 = vpack.c.bf16 %v916, %v915
        %v976 = vpack.c.bf16 %v918, %v917
        %v977 = vpack.c.bf16 %v920, %v919
        %v978 = vpack.c.bf16 %v922, %v921
        %v979 = vpack.c.bf16 %v924, %v923
        %v980 = vpack.c.bf16 %v926, %v925
        %v981 = vpack.c.bf16 %v928, %v927
        %v982 = vpack.c.bf16 %v930, %v929
        %v983 = vpack.c.bf16 %v932, %v931
        %v984 = vpack.c.bf16 %v934, %v933
        %v985 = vpack.c.bf16 %v936, %v935
        %v986 = vpack.c.bf16 %v938, %v937
        %v987 = vpack.c.bf16 %v940, %v939
        %v988 = vpack.c.bf16 %v942, %v941
        %v989 = vpack.c.bf16 %v944, %v943
        %v990 = vpack.c.bf16 %v946, %v945
        %v991 = vpack.c.bf16 %v948, %v947
        %v992 = vpack.c.bf16 %v950, %v949
        %v993 = vpack.c.bf16 %v952, %v951
        %v994 = vpack.c.bf16 %v954, %v953
        %v995 = vpack.c.bf16 %v956, %v955
        %v996 = vpack.c.bf16 %v958, %v957
        %v997 = vpack.c.bf16 %v960, %v959
        %v998 = vpack.c.bf16 %v962, %v961
        %v999 = vpack.c.bf16 %v964, %v963
        %v1000 = vpack.c.bf16 %v966, %v965
        %v1001 = vpack.c.bf16 %v968, %v967
        %v1002 = vpack.c.bf16 %v970, %v969
        %v1003 = vld [vmem:[%s3] sm:$0xf]
        %v1004 = vld [vmem:[%s3 + $0x4] sm:$0xf]
        %v1005 = vld [vmem:[%s3 + $0x8] sm:$0xf]
        %v1006 = vld [vmem:[%s3 + $0xc] sm:$0xf]
        %v1007 = vld [vmem:[%s4] sm:$0x1]
        %v1009 = vlaneseq
        %v1010 = vshrl.u32 %v1009, 7
        %v1011 = vsub.s32 0, %v1010
        %v1012 = vrot.slane %v1007, %v1011
        %v1018 = vunpack.c.l.b16 %v1003
        %v1019 = vunpack.c.l.b16 %v1004
        %v1020 = vunpack.c.l.b16 %v1005
        %v1021 = vunpack.c.l.b16 %v1006
        %v1022 = vpack.c.b16 %v1019, %v1018
        %v1023 = vpack.c.b16 %v1021, %v1020
        %vm1026 = vcmask 261120
        %v1028 = vsel %vm1026, %v971, 0
        %v1031 = vsel %vm1026, %v972, 0
        %v1034 = vsel %vm1026, %v973, 0
        %v1037 = vsel %vm1026, %v974, 0
        %v1040 = vsel %vm1026, %v975, 0
        %v1043 = vsel %vm1026, %v976, 0
        %v1046 = vsel %vm1026, %v977, 0
        %v1049 = vsel %vm1026, %v978, 0
        %v1052 = vsel %vm1026, %v979, 0
        %v1055 = vsel %vm1026, %v980, 0
        %v1058 = vsel %vm1026, %v981, 0
        %v1061 = vsel %vm1026, %v982, 0
        %v1064 = vsel %vm1026, %v983, 0
        %v1067 = vsel %vm1026, %v984, 0
        %v1070 = vsel %vm1026, %v985, 0
        %v1073 = vsel %vm1026, %v986, 0
        %v1076 = vsel %vm1026, %v987, 0
        %v1079 = vsel %vm1026, %v988, 0
        %v1082 = vsel %vm1026, %v989, 0
        %v1085 = vsel %vm1026, %v990, 0
        %v1088 = vsel %vm1026, %v991, 0
        %v1091 = vsel %vm1026, %v992, 0
        %v1094 = vsel %vm1026, %v993, 0
        %v1097 = vsel %vm1026, %v994, 0
        %v1100 = vsel %vm1026, %v995, 0
        %v1103 = vsel %vm1026, %v996, 0
        %v1106 = vsel %vm1026, %v997, 0
        %v1109 = vsel %vm1026, %v998, 0
        %v1112 = vsel %vm1026, %v999, 0
        %v1115 = vsel %vm1026, %v1000, 0
        %v1118 = vsel %vm1026, %v1001, 0
        %v1121 = vsel %vm1026, %v1002, 0
        %1123 = vmatprep.subr.bf16.mxu0 0
        %1124 = vmatpush1.bf16.msra.mxu0 %v1022
        %1125 = vmatprep.subr.bf16.mxu0 0
        %1126 = vmatpush1.bf16.msra.mxu0 %v1023
        %1127 = vmatprep.subr.bf16.mxu0 0
        %1128 = vmatpush1.bf16.msra.mxu0 0
        %1129 = vmatprep.subr.bf16.mxu0 0
        %1130 = vmatpush1.bf16.msra.mxu0 0
        %1131 = vmatprep.subr.bf16.mxu0 0
        %1132 = vmatpush1.bf16.msra.mxu0 0
        %1133 = vmatprep.subr.bf16.mxu0 0
        %1134 = vmatpush1.bf16.msra.mxu0 0
        %1135 = vmatprep.subr.bf16.mxu0 0
        %1136 = vmatpush1.bf16.msra.mxu0 0
        %1137 = vmatprep.subr.bf16.mxu0 0
        %1138 = vmatpush1.bf16.msra.mxu0 0
        %1139 = vmatprep.subr.bf16.mxu0 0
        %1140 = vmatpush1.bf16.msra.mxu0 0
        %1141 = vmatprep.subr.bf16.mxu0 0
        %1142 = vmatpush1.bf16.msra.mxu0 0
        %1143 = vmatprep.subr.bf16.mxu0 0
        %1144 = vmatpush1.bf16.msra.mxu0 0
        %1145 = vmatprep.subr.bf16.mxu0 0
        %1146 = vmatpush1.bf16.msra.mxu0 0
        %1147 = vmatprep.subr.bf16.mxu0 0
        %1148 = vmatpush1.bf16.msra.mxu0 0
        %1149 = vmatprep.subr.bf16.mxu0 0
        %1150 = vmatpush1.bf16.msra.mxu0 0
        %1151 = vmatprep.subr.bf16.mxu0 0
        %1152 = vmatpush1.bf16.msra.mxu0 0
        %1153 = vmatprep.subr.bf16.mxu0 0
        %1154 = vmatpush1.bf16.msra.mxu0 0
        %1155 = vmatprep.mubr.bf16.mxu0 0
        %1156 = vmatmul.mubr.bf16.gmra.mrb[0].mxu0 %v1028
        %v1157 = vpop.f32.mrb[0].mxu0
        %v1158 = vadd.f32 %v1012, %v1157
        %v1159 = vpop.f32.mrb[0].mxu0
        %v1160 = vpop.f32.mrb[0].mxu0
        %v1161 = vadd.f32 %v1012, %v1160
        %v1162 = vpop.f32.mrb[0].mxu0
        %1163 = vmatprep.mubr.bf16.mxu0 0
        %1164 = vmatmul.mubr.bf16.gmra.mrb[0].mxu0 %v1031
        %v1165 = vpop.f32.mrb[0].mxu0
        %v1166 = vadd.f32 %v1012, %v1165
        %v1167 = vpop.f32.mrb[0].mxu0
        %v1168 = vpop.f32.mrb[0].mxu0
        %v1169 = vadd.f32 %v1012, %v1168
        %v1170 = vpop.f32.mrb[0].mxu0
        %1171 = vmatprep.mubr.bf16.mxu0 0
        %1172 = vmatmul.mubr.bf16.gmra.mrb[0].mxu0 %v1034
        %v1173 = vpop.f32.mrb[0].mxu0
        %v1174 = vadd.f32 %v1012, %v1173
        %v1175 = vpop.f32.mrb[0].mxu0
        %v1176 = vpop.f32.mrb[0].mxu0
        %v1177 = vadd.f32 %v1012, %v1176
        %v1178 = vpop.f32.mrb[0].mxu0
        %1179 = vmatprep.mubr.bf16.mxu0 0
        %1180 = vmatmul.mubr.bf16.gmra.mrb[0].mxu0 %v1037
        %v1181 = vpop.f32.mrb[0].mxu0
        %v1182 = vadd.f32 %v1012, %v1181
        %v1183 = vpop.f32.mrb[0].mxu0
        %v1184 = vpop.f32.mrb[0].mxu0
        %v1185 = vadd.f32 %v1012, %v1184
        %v1186 = vpop.f32.mrb[0].mxu0
        %1187 = vmatprep.mubr.bf16.mxu0 0
        %1188 = vmatmul.mubr.bf16.gmra.mrb[0].mxu0 %v1040
        %v1189 = vpop.f32.mrb[0].mxu0
        %v1190 = vadd.f32 %v1012, %v1189
        %v1191 = vpop.f32.mrb[0].mxu0
        %v1192 = vpop.f32.mrb[0].mxu0
        %v1193 = vadd.f32 %v1012, %v1192
        %v1194 = vpop.f32.mrb[0].mxu0
        %1195 = vmatprep.mubr.bf16.mxu0 0
        %1196 = vmatmul.mubr.bf16.gmra.mrb[0].mxu0 %v1043
        %v1197 = vpop.f32.mrb[0].mxu0
        %v1198 = vadd.f32 %v1012, %v1197
        %v1199 = vpop.f32.mrb[0].mxu0
        %v1200 = vpop.f32.mrb[0].mxu0
        %v1201 = vadd.f32 %v1012, %v1200
        %v1202 = vpop.f32.mrb[0].mxu0
        %1203 = vmatprep.mubr.bf16.mxu0 0
        %1204 = vmatmul.mubr.bf16.gmra.mrb[0].mxu0 %v1046
        %v1205 = vpop.f32.mrb[0].mxu0
        %v1206 = vadd.f32 %v1012, %v1205
        %v1207 = vpop.f32.mrb[0].mxu0
        %v1208 = vpop.f32.mrb[0].mxu0
        %v1209 = vadd.f32 %v1012, %v1208
        %v1210 = vpop.f32.mrb[0].mxu0
        %1211 = vmatprep.mubr.bf16.mxu0 0
        %1212 = vmatmul.mubr.bf16.gmra.mrb[0].mxu0 %v1049
        %v1213 = vpop.f32.mrb[0].mxu0
        %v1214 = vadd.f32 %v1012, %v1213
        %v1215 = vpop.f32.mrb[0].mxu0
        %v1216 = vpop.f32.mrb[0].mxu0
        %v1217 = vadd.f32 %v1012, %v1216
        %v1218 = vpop.f32.mrb[0].mxu0
        %1219 = vmatprep.mubr.bf16.mxu0 0
        %1220 = vmatmul.mubr.bf16.gmra.mrb[0].mxu0 %v1052
        %v1221 = vpop.f32.mrb[0].mxu0
        %v1222 = vadd.f32 %v1012, %v1221
        %v1223 = vpop.f32.mrb[0].mxu0
        %v1224 = vpop.f32.mrb[0].mxu0
        %v1225 = vadd.f32 %v1012, %v1224
        %v1226 = vpop.f32.mrb[0].mxu0
        %1227 = vmatprep.mubr.bf16.mxu0 0
        %1228 = vmatmul.mubr.bf16.gmra.mrb[0].mxu0 %v1055
        %v1229 = vpop.f32.mrb[0].mxu0
        %v1230 = vadd.f32 %v1012, %v1229
        %v1231 = vpop.f32.mrb[0].mxu0
        %v1232 = vpop.f32.mrb[0].mxu0
        %v1233 = vadd.f32 %v1012, %v1232
        %v1234 = vpop.f32.mrb[0].mxu0
        %1235 = vmatprep.mubr.bf16.mxu0 0
        %1236 = vmatmul.mubr.bf16.gmra.mrb[0].mxu0 %v1058
        %v1237 = vpop.f32.mrb[0].mxu0
        %v1238 = vadd.f32 %v1012, %v1237
        %v1239 = vpop.f32.mrb[0].mxu0
        %v1240 = vpop.f32.mrb[0].mxu0
        %v1241 = vadd.f32 %v1012, %v1240
        %v1242 = vpop.f32.mrb[0].mxu0
        %1243 = vmatprep.mubr.bf16.mxu0 0
        %1244 = vmatmul.mubr.bf16.gmra.mrb[0].mxu0 %v1061
        %v1245 = vpop.f32.mrb[0].mxu0
        %v1246 = vadd.f32 %v1012, %v1245
        %v1247 = vpop.f32.mrb[0].mxu0
        %v1248 = vpop.f32.mrb[0].mxu0
        %v1249 = vadd.f32 %v1012, %v1248
        %v1250 = vpop.f32.mrb[0].mxu0
        %1251 = vmatprep.mubr.bf16.mxu0 0
        %1252 = vmatmul.mubr.bf16.gmra.mrb[0].mxu0 %v1064
        %v1253 = vpop.f32.mrb[0].mxu0
        %v1254 = vadd.f32 %v1012, %v1253
        %v1255 = vpop.f32.mrb[0].mxu0
        %v1256 = vpop.f32.mrb[0].mxu0
        %v1257 = vadd.f32 %v1012, %v1256
        %v1258 = vpop.f32.mrb[0].mxu0
        %1259 = vmatprep.mubr.bf16.mxu0 0
        %1260 = vmatmul.mubr.bf16.gmra.mrb[0].mxu0 %v1067
        %v1261 = vpop.f32.mrb[0].mxu0
        %v1262 = vadd.f32 %v1012, %v1261
        %v1263 = vpop.f32.mrb[0].mxu0
        %v1264 = vpop.f32.mrb[0].mxu0
        %v1265 = vadd.f32 %v1012, %v1264
        %v1266 = vpop.f32.mrb[0].mxu0
        %1267 = vmatprep.mubr.bf16.mxu0 0
        %1268 = vmatmul.mubr.bf16.gmra.mrb[0].mxu0 %v1070
        %v1269 = vpop.f32.mrb[0].mxu0
        %v1270 = vadd.f32 %v1012, %v1269
        %v1271 = vpop.f32.mrb[0].mxu0
        %v1272 = vpop.f32.mrb[0].mxu0
        %v1273 = vadd.f32 %v1012, %v1272
        %v1274 = vpop.f32.mrb[0].mxu0
        %1275 = vmatprep.mubr.bf16.mxu0 0
        %1276 = vmatmul.mubr.bf16.gmra.mrb[0].mxu0 %v1073
        %v1277 = vpop.f32.mrb[0].mxu0
        %v1278 = vadd.f32 %v1012, %v1277
        %v1279 = vpop.f32.mrb[0].mxu0
        %v1280 = vpop.f32.mrb[0].mxu0
        %v1281 = vadd.f32 %v1012, %v1280
        %v1282 = vpop.f32.mrb[0].mxu0
        %1283 = vmatprep.mubr.bf16.mxu0 0
        %1284 = vmatmul.mubr.bf16.gmra.mrb[0].mxu0 %v1076
        %v1285 = vpop.f32.mrb[0].mxu0
        %v1286 = vadd.f32 %v1012, %v1285
        %v1287 = vpop.f32.mrb[0].mxu0
        %v1288 = vpop.f32.mrb[0].mxu0
        %v1289 = vadd.f32 %v1012, %v1288
        %v1290 = vpop.f32.mrb[0].mxu0
        %1291 = vmatprep.mubr.bf16.mxu0 0
        %1292 = vmatmul.mubr.bf16.gmra.mrb[0].mxu0 %v1079
        %v1293 = vpop.f32.mrb[0].mxu0
        %v1294 = vadd.f32 %v1012, %v1293
        %v1295 = vpop.f32.mrb[0].mxu0
        %v1296 = vpop.f32.mrb[0].mxu0
        %v1297 = vadd.f32 %v1012, %v1296
        %v1298 = vpop.f32.mrb[0].mxu0
        %1299 = vmatprep.mubr.bf16.mxu0 0
        %1300 = vmatmul.mubr.bf16.gmra.mrb[0].mxu0 %v1082
        %v1301 = vpop.f32.mrb[0].mxu0
        %v1302 = vadd.f32 %v1012, %v1301
        %v1303 = vpop.f32.mrb[0].mxu0
        %v1304 = vpop.f32.mrb[0].mxu0
        %v1305 = vadd.f32 %v1012, %v1304
        %v1306 = vpop.f32.mrb[0].mxu0
        %1307 = vmatprep.mubr.bf16.mxu0 0
        %1308 = vmatmul.mubr.bf16.gmra.mrb[0].mxu0 %v1085
        %v1309 = vpop.f32.mrb[0].mxu0
        %v1310 = vadd.f32 %v1012, %v1309
        %v1311 = vpop.f32.mrb[0].mxu0
        %v1312 = vpop.f32.mrb[0].mxu0
        %v1313 = vadd.f32 %v1012, %v1312
        %v1314 = vpop.f32.mrb[0].mxu0
        %1315 = vmatprep.mubr.bf16.mxu0 0
        %1316 = vmatmul.mubr.bf16.gmra.mrb[0].mxu0 %v1088
        %v1317 = vpop.f32.mrb[0].mxu0
        %v1318 = vadd.f32 %v1012, %v1317
        %v1319 = vpop.f32.mrb[0].mxu0
        %v1320 = vpop.f32.mrb[0].mxu0
        %v1321 = vadd.f32 %v1012, %v1320
        %v1322 = vpop.f32.mrb[0].mxu0
        %1323 = vmatprep.mubr.bf16.mxu0 0
        %1324 = vmatmul.mubr.bf16.gmra.mrb[0].mxu0 %v1091
        %v1325 = vpop.f32.mrb[0].mxu0
        %v1326 = vadd.f32 %v1012, %v1325
        %v1327 = vpop.f32.mrb[0].mxu0
        %v1328 = vpop.f32.mrb[0].mxu0
        %v1329 = vadd.f32 %v1012, %v1328
        %v1330 = vpop.f32.mrb[0].mxu0
        %1331 = vmatprep.mubr.bf16.mxu0 0
        %1332 = vmatmul.mubr.bf16.gmra.mrb[0].mxu0 %v1094
        %v1333 = vpop.f32.mrb[0].mxu0
        %v1334 = vadd.f32 %v1012, %v1333
        %v1335 = vpop.f32.mrb[0].mxu0
        %v1336 = vpop.f32.mrb[0].mxu0
        %v1337 = vadd.f32 %v1012, %v1336
        %v1338 = vpop.f32.mrb[0].mxu0
        %1339 = vmatprep.mubr.bf16.mxu0 0
        %1340 = vmatmul.mubr.bf16.gmra.mrb[0].mxu0 %v1097
        %v1341 = vpop.f32.mrb[0].mxu0
        %v1342 = vadd.f32 %v1012, %v1341
        %v1343 = vpop.f32.mrb[0].mxu0
        %v1344 = vpop.f32.mrb[0].mxu0
        %v1345 = vadd.f32 %v1012, %v1344
        %v1346 = vpop.f32.mrb[0].mxu0
        %1347 = vmatprep.mubr.bf16.mxu0 0
        %1348 = vmatmul.mubr.bf16.gmra.mrb[0].mxu0 %v1100
        %v1349 = vpop.f32.mrb[0].mxu0
        %v1350 = vadd.f32 %v1012, %v1349
        %v1351 = vpop.f32.mrb[0].mxu0
        %v1352 = vpop.f32.mrb[0].mxu0
        %v1353 = vadd.f32 %v1012, %v1352
        %v1354 = vpop.f32.mrb[0].mxu0
        %1355 = vmatprep.mubr.bf16.mxu0 0
        %1356 = vmatmul.mubr.bf16.gmra.mrb[0].mxu0 %v1103
        %v1357 = vpop.f32.mrb[0].mxu0
        %v1358 = vadd.f32 %v1012, %v1357
        %v1359 = vpop.f32.mrb[0].mxu0
        %v1360 = vpop.f32.mrb[0].mxu0
        %v1361 = vadd.f32 %v1012, %v1360
        %v1362 = vpop.f32.mrb[0].mxu0
        %1363 = vmatprep.mubr.bf16.mxu0 0
        %1364 = vmatmul.mubr.bf16.gmra.mrb[0].mxu0 %v1106
        %v1365 = vpop.f32.mrb[0].mxu0
        %v1366 = vadd.f32 %v1012, %v1365
        %v1367 = vpop.f32.mrb[0].mxu0
        %v1368 = vpop.f32.mrb[0].mxu0
        %v1369 = vadd.f32 %v1012, %v1368
        %v1370 = vpop.f32.mrb[0].mxu0
        %1371 = vmatprep.mubr.bf16.mxu0 0
        %1372 = vmatmul.mubr.bf16.gmra.mrb[0].mxu0 %v1109
        %v1373 = vpop.f32.mrb[0].mxu0
        %v1374 = vadd.f32 %v1012, %v1373
        %v1375 = vpop.f32.mrb[0].mxu0
        %v1376 = vpop.f32.mrb[0].mxu0
        %v1377 = vadd.f32 %v1012, %v1376
        %v1378 = vpop.f32.mrb[0].mxu0
        %1379 = vmatprep.mubr.bf16.mxu0 0
        %1380 = vmatmul.mubr.bf16.gmra.mrb[0].mxu0 %v1112
        %v1381 = vpop.f32.mrb[0].mxu0
        %v1382 = vadd.f32 %v1012, %v1381
        %v1383 = vpop.f32.mrb[0].mxu0
        %v1384 = vpop.f32.mrb[0].mxu0
        %v1385 = vadd.f32 %v1012, %v1384
        %v1386 = vpop.f32.mrb[0].mxu0
        %1387 = vmatprep.mubr.bf16.mxu0 0
        %1388 = vmatmul.mubr.bf16.gmra.mrb[0].mxu0 %v1115
        %v1389 = vpop.f32.mrb[0].mxu0
        %v1390 = vadd.f32 %v1012, %v1389
        %v1391 = vpop.f32.mrb[0].mxu0
        %v1392 = vpop.f32.mrb[0].mxu0
        %v1393 = vadd.f32 %v1012, %v1392
        %v1394 = vpop.f32.mrb[0].mxu0
        %1395 = vmatprep.mubr.bf16.mxu0 0
        %1396 = vmatmul.mubr.bf16.gmra.mrb[0].mxu0 %v1118
        %v1397 = vpop.f32.mrb[0].mxu0
        %v1398 = vadd.f32 %v1012, %v1397
        %v1399 = vpop.f32.mrb[0].mxu0
        %v1400 = vpop.f32.mrb[0].mxu0
        %v1401 = vadd.f32 %v1012, %v1400
        %v1402 = vpop.f32.mrb[0].mxu0
        %1403 = vmatprep.mubr.bf16.mxu0 0
        %1404 = vmatmul.mubr.bf16.gmra.mrb[0].mxu0 %v1121
        %v1405 = vpop.f32.mrb[0].mxu0
        %v1406 = vadd.f32 %v1012, %v1405
        %v1407 = vpop.f32.mrb[0].mxu0
        %v1408 = vpop.f32.mrb[0].mxu0
        %v1409 = vadd.f32 %v1012, %v1408
        %v1410 = vpop.f32.mrb[0].mxu0
        %1411 = vdwg.mxu0
        %v1412 = vmax.f32 %v1158, 0.0
        %v1413 = vmax.f32 %v1161, 0.0
        %v1414 = vmax.f32 %v1166, 0.0
        %v1415 = vmax.f32 %v1169, 0.0
        %v1416 = vmax.f32 %v1174, 0.0
        %v1417 = vmax.f32 %v1177, 0.0
        %v1418 = vmax.f32 %v1182, 0.0
        %v1419 = vmax.f32 %v1185, 0.0
        %v1420 = vmax.f32 %v1190, 0.0
        %v1421 = vmax.f32 %v1193, 0.0
        %v1422 = vmax.f32 %v1198, 0.0
        %v1423 = vmax.f32 %v1201, 0.0
        %v1424 = vmax.f32 %v1206, 0.0
        %v1425 = vmax.f32 %v1209, 0.0
        %v1426 = vmax.f32 %v1214, 0.0
        %v1427 = vmax.f32 %v1217, 0.0
        %v1428 = vmax.f32 %v1222, 0.0
        %v1429 = vmax.f32 %v1225, 0.0
        %v1430 = vmax.f32 %v1230, 0.0
        %v1431 = vmax.f32 %v1233, 0.0
        %v1432 = vmax.f32 %v1238, 0.0
        %v1433 = vmax.f32 %v1241, 0.0
        %v1434 = vmax.f32 %v1246, 0.0
        %v1435 = vmax.f32 %v1249, 0.0
        %v1436 = vmax.f32 %v1254, 0.0
        %v1437 = vmax.f32 %v1257, 0.0
        %v1438 = vmax.f32 %v1262, 0.0
        %v1439 = vmax.f32 %v1265, 0.0
        %v1440 = vmax.f32 %v1270, 0.0
        %v1441 = vmax.f32 %v1273, 0.0
        %v1442 = vmax.f32 %v1278, 0.0
        %v1443 = vmax.f32 %v1281, 0.0
        %v1444 = vmax.f32 %v1286, 0.0
        %v1445 = vmax.f32 %v1289, 0.0
        %v1446 = vmax.f32 %v1294, 0.0
        %v1447 = vmax.f32 %v1297, 0.0
        %v1448 = vmax.f32 %v1302, 0.0
        %v1449 = vmax.f32 %v1305, 0.0
        %v1450 = vmax.f32 %v1310, 0.0
        %v1451 = vmax.f32 %v1313, 0.0
        %v1452 = vmax.f32 %v1318, 0.0
        %v1453 = vmax.f32 %v1321, 0.0
        %v1454 = vmax.f32 %v1326, 0.0
        %v1455 = vmax.f32 %v1329, 0.0
        %v1456 = vmax.f32 %v1334, 0.0
        %v1457 = vmax.f32 %v1337, 0.0
        %v1458 = vmax.f32 %v1342, 0.0
        %v1459 = vmax.f32 %v1345, 0.0
        %v1460 = vmax.f32 %v1350, 0.0
        %v1461 = vmax.f32 %v1353, 0.0
        %v1462 = vmax.f32 %v1358, 0.0
        %v1463 = vmax.f32 %v1361, 0.0
        %v1464 = vmax.f32 %v1366, 0.0
        %v1465 = vmax.f32 %v1369, 0.0
        %v1466 = vmax.f32 %v1374, 0.0
        %v1467 = vmax.f32 %v1377, 0.0
        %v1468 = vmax.f32 %v1382, 0.0
        %v1469 = vmax.f32 %v1385, 0.0
        %v1470 = vmax.f32 %v1390, 0.0
        %v1471 = vmax.f32 %v1393, 0.0
        %v1472 = vmax.f32 %v1398, 0.0
        %v1473 = vmax.f32 %v1401, 0.0
        %v1474 = vmax.f32 %v1406, 0.0
        %v1475 = vmax.f32 %v1409, 0.0
        %v1476 = vpack.c.bf16 %v1413, %v1412
        %v1477 = vpack.c.bf16 %v1415, %v1414
        %v1478 = vpack.c.bf16 %v1417, %v1416
        %v1479 = vpack.c.bf16 %v1419, %v1418
        %v1480 = vpack.c.bf16 %v1421, %v1420
        %v1481 = vpack.c.bf16 %v1423, %v1422
        %v1482 = vpack.c.bf16 %v1425, %v1424
        %v1483 = vpack.c.bf16 %v1427, %v1426
        %v1484 = vpack.c.bf16 %v1429, %v1428
        %v1485 = vpack.c.bf16 %v1431, %v1430
        %v1486 = vpack.c.bf16 %v1433, %v1432
        %v1487 = vpack.c.bf16 %v1435, %v1434
        %v1488 = vpack.c.bf16 %v1437, %v1436
        %v1489 = vpack.c.bf16 %v1439, %v1438
        %v1490 = vpack.c.bf16 %v1441, %v1440
        %v1491 = vpack.c.bf16 %v1443, %v1442
        %v1492 = vpack.c.bf16 %v1445, %v1444
        %v1493 = vpack.c.bf16 %v1447, %v1446
        %v1494 = vpack.c.bf16 %v1449, %v1448
        %v1495 = vpack.c.bf16 %v1451, %v1450
        %v1496 = vpack.c.bf16 %v1453, %v1452
        %v1497 = vpack.c.bf16 %v1455, %v1454
        %v1498 = vpack.c.bf16 %v1457, %v1456
        %v1499 = vpack.c.bf16 %v1459, %v1458
        %v1500 = vpack.c.bf16 %v1461, %v1460
        %v1501 = vpack.c.bf16 %v1463, %v1462
        %v1502 = vpack.c.bf16 %v1465, %v1464
        %v1503 = vpack.c.bf16 %v1467, %v1466
        %v1504 = vpack.c.bf16 %v1469, %v1468
        %v1505 = vpack.c.bf16 %v1471, %v1470
        %v1506 = vpack.c.bf16 %v1473, %v1472
        %v1507 = vpack.c.bf16 %v1475, %v1474
        %v1508 = vld [vmem:[%s5] sm:$0x1]
        %s1509 = sld [smem:[#allocation2]]
        %v1510 = vstv %s1509
        %v1512 = vsel %vm1026, %v1508, 0
        %v1515 = vsel %vm1026, %v1476, 0
        %v1518 = vsel %vm1026, %v1477, 0
        %v1521 = vsel %vm1026, %v1478, 0
        %v1524 = vsel %vm1026, %v1479, 0
        %v1527 = vsel %vm1026, %v1480, 0
        %v1530 = vsel %vm1026, %v1481, 0
        %v1533 = vsel %vm1026, %v1482, 0
        %v1536 = vsel %vm1026, %v1483, 0
        %v1539 = vsel %vm1026, %v1484, 0
        %v1542 = vsel %vm1026, %v1485, 0
        %v1545 = vsel %vm1026, %v1486, 0
        %v1548 = vsel %vm1026, %v1487, 0
        %v1551 = vsel %vm1026, %v1488, 0
        %v1554 = vsel %vm1026, %v1489, 0
        %v1557 = vsel %vm1026, %v1490, 0
        %v1560 = vsel %vm1026, %v1491, 0
        %v1563 = vsel %vm1026, %v1492, 0
        %v1566 = vsel %vm1026, %v1493, 0
        %v1569 = vsel %vm1026, %v1494, 0
        %v1572 = vsel %vm1026, %v1495, 0
        %v1575 = vsel %vm1026, %v1496, 0
        %v1578 = vsel %vm1026, %v1497, 0
        %v1581 = vsel %vm1026, %v1498, 0
        %v1584 = vsel %vm1026, %v1499, 0
        %v1587 = vsel %vm1026, %v1500, 0
        %v1590 = vsel %vm1026, %v1501, 0
        %v1593 = vsel %vm1026, %v1502, 0
        %v1596 = vsel %vm1026, %v1503, 0
        %v1599 = vsel %vm1026, %v1504, 0
        %v1602 = vsel %vm1026, %v1505, 0
        %v1605 = vsel %vm1026, %v1506, 0
        %v1608 = vsel %vm1026, %v1507, 0
        %1610 = vmatprep.subr.bf16.mxu0 0
        %1611 = vmatpush1.bf16.xpose.msra.mxu0 %v1515
        %1612 = vmatprep.subr.bf16.mxu0 0
        %1613 = vmatpush1.bf16.xpose.msra.mxu0 %v1518
        %1614 = vmatprep.subr.bf16.mxu0 0
        %1615 = vmatpush1.bf16.xpose.msra.mxu0 %v1521
        %1616 = vmatprep.subr.bf16.mxu0 0
        %1617 = vmatpush1.bf16.xpose.msra.mxu0 %v1524
        %1618 = vmatprep.subr.bf16.mxu0 0
        %1619 = vmatpush1.bf16.xpose.msra.mxu0 %v1527
        %1620 = vmatprep.subr.bf16.mxu0 0
        %1621 = vmatpush1.bf16.xpose.msra.mxu0 %v1530
        %1622 = vmatprep.subr.bf16.mxu0 0
        %1623 = vmatpush1.bf16.xpose.msra.mxu0 %v1533
        %1624 = vmatprep.subr.bf16.mxu0 0
        %1625 = vmatpush1.bf16.xpose.msra.mxu0 %v1536
        %1626 = vmatprep.subr.bf16.mxu0 0
        %1627 = vmatpush1.bf16.xpose.msra.mxu0 %v1539
        %1628 = vmatprep.subr.bf16.mxu0 0
        %1629 = vmatpush1.bf16.xpose.msra.mxu0 %v1542
        %1630 = vmatprep.subr.bf16.mxu0 0
        %1631 = vmatpush1.bf16.xpose.msra.mxu0 %v1545
        %1632 = vmatprep.subr.bf16.mxu0 0
        %1633 = vmatpush1.bf16.xpose.msra.mxu0 %v1548
        %1634 = vmatprep.subr.bf16.mxu0 0
        %1635 = vmatpush1.bf16.xpose.msra.mxu0 %v1551
        %1636 = vmatprep.subr.bf16.mxu0 0
        %1637 = vmatpush1.bf16.xpose.msra.mxu0 %v1554
        %1638 = vmatprep.subr.bf16.mxu0 0
        %1639 = vmatpush1.bf16.xpose.msra.mxu0 %v1557
        %1640 = vmatprep.subr.bf16.mxu0 0
        %1641 = vmatpush1.bf16.xpose.msra.mxu0 %v1560
        %1642 = vmatprep.mubr.bf16.mxu0 0
        %1643 = vmatmul.mubr.bf16.gmra.mrb[0].mxu0 %v1512
        %v1644 = vpop.f32.mrb[0].mxu0
        %v1645 = vadd.f32 %v1510, %v1644
        %v1646 = vpop.f32.mrb[0].mxu0
        %v1647 = vadd.f32 %v1510, %v1646
        %v1648 = vpop.f32.mrb[0].mxu0
        %v1649 = vpop.f32.mrb[0].mxu0
        %1650 = vdwg.mxu0
        %1651 = vmatprep.subr.bf16.mxu0 0
        %1652 = vmatpush1.bf16.xpose.msra.mxu0 %v1563
        %1653 = vmatprep.subr.bf16.mxu0 0
        %1654 = vmatpush1.bf16.xpose.msra.mxu0 %v1566
        %1655 = vmatprep.subr.bf16.mxu0 0
        %1656 = vmatpush1.bf16.xpose.msra.mxu0 %v1569
        %1657 = vmatprep.subr.bf16.mxu0 0
        %1658 = vmatpush1.bf16.xpose.msra.mxu0 %v1572
        %1659 = vmatprep.subr.bf16.mxu0 0
        %1660 = vmatpush1.bf16.xpose.msra.mxu0 %v1575
        %1661 = vmatprep.subr.bf16.mxu0 0
        %1662 = vmatpush1.bf16.xpose.msra.mxu0 %v1578
        %1663 = vmatprep.subr.bf16.mxu0 0
        %1664 = vmatpush1.bf16.xpose.msra.mxu0 %v1581
        %1665 = vmatprep.subr.bf16.mxu0 0
        %1666 = vmatpush1.bf16.xpose.msra.mxu0 %v1584
        %1667 = vmatprep.subr.bf16.mxu0 0
        %1668 = vmatpush1.bf16.xpose.msra.mxu0 %v1587
        %1669 = vmatprep.subr.bf16.mxu0 0
        %1670 = vmatpush1.bf16.xpose.msra.mxu0 %v1590
        %1671 = vmatprep.subr.bf16.mxu0 0
        %1672 = vmatpush1.bf16.xpose.msra.mxu0 %v1593
        %1673 = vmatprep.subr.bf16.mxu0 0
        %1674 = vmatpush1.bf16.xpose.msra.mxu0 %v1596
        %1675 = vmatprep.subr.bf16.mxu0 0
        %1676 = vmatpush1.bf16.xpose.msra.mxu0 %v1599
        %1677 = vmatprep.subr.bf16.mxu0 0
        %1678 = vmatpush1.bf16.xpose.msra.mxu0 %v1602
        %1679 = vmatprep.subr.bf16.mxu0 0
        %1680 = vmatpush1.bf16.xpose.msra.mxu0 %v1605
        %1681 = vmatprep.subr.bf16.mxu0 0
        %1682 = vmatpush1.bf16.xpose.msra.mxu0 %v1608
        %1683 = vmatprep.mubr.bf16.mxu0 0
        %1684 = vmatmul.mubr.bf16.gmra.mrb[0].mxu0 %v1512
        %v1685 = vpop.f32.mrb[0].mxu0
        %v1686 = vadd.f32 %v1510, %v1685
        %v1687 = vpop.f32.mrb[0].mxu0
        %v1688 = vadd.f32 %v1510, %v1687
        %v1689 = vpop.f32.mrb[0].mxu0
        %v1690 = vpop.f32.mrb[0].mxu0
        %1691 = vdwg.mxu0
        %v1696 = vcombine.low %v1645, %v1647
        %v1697 = vcombine.low %v1686, %v1688
        %v1699 = vunpack.c.l.s4 1966171168
        %v1700 = vunpack.c.0.s8 %v1699
        %v1701 = vlaneseq
        %v1702 = vshrl.u32 %v1701, 7
        %v1703 = vsub.s32 %v1700, %v1702
        %v1704 = vrot.slane %v1696, %v1703
        %v1706 = vunpack.c.l.s4 1966171168
        %v1707 = vunpack.c.0.s8 %v1706
        %v1708 = vlaneseq
        %v1709 = vshrl.u32 %v1708, 7
        %v1710 = vsub.s32 %v1707, %v1709
        %v1711 = vrot.slane %v1697, %v1710
        %v1712 = vcombine.low %v1704, %v1711
        %v1714 = vunpack.c.l.s4 1966171168
        %v1715 = vunpack.c.0.s8 %v1714
        %v1716 = vlaneseq
        %v1717 = vshrl.u32 %v1716, 7
        %v1718 = vsub.s32 %v1715, %v1717
        %v1719 = vrot.slane %v1712, %v1718
        %v1721 = vlaneseq
        %vm1722 = vcmp.ge.s32.totalorder %v1721, 0
        %vm1723 = vcmp.lt.s32.totalorder %v1721, 512
        %vm1724 = vmand %vm1722, %vm1723
        %1725 = vst.msk [vmem:[%s273] sm:$0xf] %vm1724, %v1719
        %s1726 = sand.u32 %s182, 1
        %s1727 = scalar_lea.sflag [#allocation4], %s1726
        %s1728 = sand.u32 %s182, 1
        %s1729 = smul.addr %s1728, 4
        %s1730 = scalar_lea.vmem [#allocation3], %s1729
        // Predicated region
        $region49: #{tpu_custom_call.1} parent=47 // pred_check
          %p1731 = pneg %p192
        $region50: #{tpu_custom_call.1} parent=47 // pred_check_branch
          %1733 = sbr.rel (%p1731) target = $region52
        $region51: #{tpu_custom_call.1} parent=47 // pred_region
          %s1734 = smul.u32 4, %s22
          %s1736 = ssub.s32 64, 64
          %1737 = vsyncadd %s1727, %s1736
          %s1738 = smul.addr %s1734, 16
          %s1739 = scalar_lea.hbm %s7, %s1738
          %s1741 = sshll.u32 %s1730, 4
          %s1742 = int_to_ptr.vmem [resolvable:$true] %s1741
          %1744 = dma.vmem_to_hbm [thread:$0]  %s1742, 64, %s1739, %s1727
        $region52: #{tpu_custom_call.1} parent=47 // pred_fallthru
          _
      $region48: #{tpu_custom_call.1} parent=5 // pred_fallthru
        _
      %p1745 = scmp.le.s32.totalorder 2, %s17
      // Predicated region
      $region53: #{tpu_custom_call.1} parent=5 // pred_check
        %p1746 = pneg %p1745
      $region54: #{tpu_custom_call.1} parent=5 // pred_check_branch
        %1748 = sbr.rel (%p1746) target = $region56
      $region55: #{tpu_custom_call.1} parent=5 // pred_region
        %s1749 = ssub.s32 %s17, 2
        // Predicated region
        $region57: #{tpu_custom_call.1} parent=55 // pred_check
          %p1750 = pneg %p198
        $region58: #{tpu_custom_call.1} parent=55 // pred_check_branch
          %1752 = sbr.rel (%p1750) target = $region60
        $region59: #{tpu_custom_call.1} parent=55 // pred_region
          %s1753 = sand.u32 %s183, 1
          %s1754 = scalar_lea.sflag [#allocation4], %s1753
          %s1755 = sand.u32 %s183, 1
          %s1756 = smul.addr %s1755, 4
          %s1757 = scalar_lea.vmem [#allocation3], %s1756
          %1758 = dma.done %s1754, 64
        $region60: #{tpu_custom_call.1} parent=55 // pred_fallthru
          _
      $region56: #{tpu_custom_call.1} parent=5 // pred_fallthru
        _
    $region6: #{tpu_custom_call.1} parent=1 // loop_footer
      %s21 = sadd.s32 1, %s17
    $region7: #{tpu_custom_call.1} parent=1 // loop_footer_branch
      %16 = sbr.rel target = $region3
    $region8: #{tpu_custom_call.1} parent=1 // loop_exit
      _
    %1759 = vsyncpa [#allocation4], 1
    %s1760 = scalar_lea.sflag [#allocation4], 1
    %1761 = vsyncpa %s1760, 1

</llo_original>
